<compile_context>
chip_gen: v7x
topology: tpu7x:2x2x1
jax: 0.10.0
libtpu: 0.0.40
codegen_flags: <defaults>
</compile_context>

<pallas_src>
import functools
import math

import jax
import jax.numpy as jnp
from jax import lax
from jax.experimental import pallas as pl
from jax.experimental.pallas import tpu as pltpu

EPS = 1e-5                 # torch.nn.GroupNorm default
LANE = 128
NUM_GROUPS = 16


# --------------------------------------------------------------------------------------
# Generation-aware configuration
# --------------------------------------------------------------------------------------
def _vmem_capacity_bytes():
    try:
        return int(pltpu.get_tpu_info().vmem_capacity_bytes)
    except Exception:
        return 64 * 1024 * 1024        # conservative (v7x-sized) fallback


def _default_tq():
    try:
        kind = jax.devices()[0].device_kind.lower()
    except Exception:
        kind = ""
    if any(t in kind for t in ("v2", "v3", "v4", "v5 lite", "v5lite", "v5e")):
        return 256       # lower roofline crossover: TQ=256 is already compute-bound
    return 512           # v6e / v7x: larger q tile to cross the ~650 FLOP/B crossover


VMEM_CAP = _vmem_capacity_bytes()
VMEM_LIMIT = int(0.75 * VMEM_CAP)      # scoped-VMEM budget handed to Mosaic
VMEM_PLAN = int(0.80 * VMEM_LIMIT)     # planning budget for path / tile selection
DEFAULT_TQ = _default_tq()


def _pick_tile(hw, target, step=16):
    """Largest divisor of hw that is <= target and a multiple of `step` (pref.) or 8."""
    if hw <= target:
        return hw
    for s in (step, 8):
        t = (target // s) * s
        while t >= s:
            if hw % t == 0:
                return t
            t -= s
    return hw


def _fused_vmem_estimate(HW, Cp):
    # x/out blocks (f32, double-buffered) + bf16 xn/q/k/v + f32 out/proj temps
    # + f32 scores/probs + double-buffered bf16 weights + slack.
    return 32 * HW * Cp + 8 * HW * HW + 16 * Cp * Cp + (1 << 20)


def _resident_vmem_estimate(HW, Cp, TQ):
    # resident bf16 K/V (double-buffered) + x/q/out tiles + f32 scores/probs + wp + slack.
    return 8 * HW * Cp + 20 * TQ * Cp + 12 * TQ * HW + 4 * Cp * Cp + (1 << 20)


# --------------------------------------------------------------------------------------
# Path A: fully fused kernel (GroupNorm + QKV + attention + proj + residual)
# --------------------------------------------------------------------------------------
def _fused_kernel(x_ref, gf_ref, gb_ref, gamma_ref, beta_ref,
                  wq_ref, wk_ref, wv_ref, bq_ref, bk_ref, bv_ref,
                  wp_ref, bp_ref, o_ref, *, inv_cpg):
    x = x_ref[0]                                                   # (HW, Cp) f32
    gf = gf_ref[...]                                               # (Cp, NG) one-hot chan->group
    gb = gb_ref[...]                                               # (NG, Cp) broadcast-back

    # Two-pass GroupNorm statistics (mean first, then mean of squared deviations).
    mean_c = jnp.mean(x, axis=0, keepdims=True)                    # (1, Cp)
    gmean = jnp.dot(mean_c, gf, preferred_element_type=jnp.float32) * inv_cpg     # (1, NG)
    mean_bc = jnp.dot(gmean, gb, preferred_element_type=jnp.float32)              # (1, Cp)
    cent = x - mean_bc
    msq_c = jnp.mean(cent * cent, axis=0, keepdims=True)           # (1, Cp)
    gvar = jnp.dot(msq_c, gf, preferred_element_type=jnp.float32) * inv_cpg       # (1, NG)
    var_bc = jnp.dot(gvar, gb, preferred_element_type=jnp.float32)                # (1, Cp)

    # Fused affine normalize (single FMA pass), cast to bf16 for the MXU.
    scale_c = lax.rsqrt(var_bc + EPS) * gamma_ref[...]
    shift_c = beta_ref[...] - mean_bc * scale_c
    xn = (x * scale_c + shift_c).astype(jnp.bfloat16)

    # Three separate (Cp, Cp) projections -> no (HW, 3Cp) f32 temp; bf16 immediately.
    # The softmax 1/sqrt(C) scale is pre-folded into wq / bq on the host.
    q = (jnp.dot(xn, wq_ref[...], preferred_element_type=jnp.float32)
         + bq_ref[...]).astype(jnp.bfloat16)
    k = (jnp.dot(xn, wk_ref[...], preferred_element_type=jnp.float32)
         + bk_ref[...]).astype(jnp.bfloat16)
    v = (jnp.dot(xn, wv_ref[...], preferred_element_type=jnp.float32)
         + bv_ref[...]).astype(jnp.bfloat16)

    # Full softmax attention, all operands VMEM-resident (NT scores, no k.T copy).
    s = lax.dot_general(q, k, (((1,), (1,)), ((), ())),
                        preferred_element_type=jnp.float32)        # (HW, HW)
    m = jnp.max(s, axis=-1, keepdims=True)
    p = jnp.exp(s - m)
    l = jnp.sum(p, axis=-1, keepdims=True)
    out = jnp.dot(p.astype(jnp.bfloat16), v, preferred_element_type=jnp.float32)
    out = out * pl.reciprocal(l, approx=True)

    proj = jnp.dot(out.astype(jnp.bfloat16), wp_ref[...],
                   preferred_element_type=jnp.float32) + bp_ref[...]
    o_ref[0] = x + proj


def _fused_attention(x_seq, prep):
    B, HW, Cp = x_seq.shape
    NG = prep["g_fwd"].shape[1]
    full = lambda shape: pl.BlockSpec(shape, lambda b: (0,) * len(shape))
    kernel = functools.partial(_fused_kernel, inv_cpg=1.0 / prep["cpg"])
    return pl.pallas_call(
        kernel,
        out_shape=jax.ShapeDtypeStruct((B, HW, Cp), jnp.float32),
        grid_spec=pltpu.PrefetchScalarGridSpec(
            num_scalar_prefetch=0,
            grid=(B,),
            in_specs=[
                pl.BlockSpec((1, HW, Cp), lambda b: (b, 0, 0)),   # x
                full((Cp, NG)), full((NG, Cp)),                   # group maps
                full((1, Cp)), full((1, Cp)),                     # gamma, beta
                full((Cp, Cp)), full((Cp, Cp)), full((Cp, Cp)),   # wq, wk, wv (bf16)
                full((1, Cp)), full((1, Cp)), full((1, Cp)),      # bq, bk, bv
                full((Cp, Cp)), full((1, Cp)),                    # wp, bp
            ],
            out_specs=pl.BlockSpec((1, HW, Cp), lambda b: (b, 0, 0)),
        ),
        compiler_params=pltpu.CompilerParams(
            dimension_semantics=("parallel",),
            vmem_limit_bytes=VMEM_LIMIT,
        ),
    )(x_seq, prep["g_fwd"], prep["g_bwd"], prep["gamma"], prep["beta"],
      prep["wq"], prep["wk"], prep["wv"], prep["bq"], prep["bk"], prep["bv"],
      prep["wp"], prep["bp"])


# --------------------------------------------------------------------------------------
# Path B, kernel 1: HW-tiled normalize + QKV (group stats precomputed in XLA)
# --------------------------------------------------------------------------------------
def _norm_qkv_kernel(x_ref, sc_ref, sh_ref, wq_ref, wk_ref, wv_ref,
                     bq_ref, bk_ref, bv_ref, q_ref, k_ref, v_ref):
    xn = (x_ref[0] * sc_ref[0] + sh_ref[0]).astype(jnp.bfloat16)   # (THW, Cp)
    q_ref[0] = (jnp.dot(xn, wq_ref[...], preferred_element_type=jnp.float32)
                + bq_ref[...]).astype(jnp.bfloat16)
    k_ref[0] = (jnp.dot(xn, wk_ref[...], preferred_element_type=jnp.float32)
                + bk_ref[...]).astype(jnp.bfloat16)
    v_ref[0] = (jnp.dot(xn, wv_ref[...], preferred_element_type=jnp.float32)
                + bv_ref[...]).astype(jnp.bfloat16)


def _norm_qkv_tiled(x_seq, scale_c, shift_c, prep, thw=512):
    B, HW, Cp = x_seq.shape
    THW = _pick_tile(HW, thw)
    nt = HW // THW
    full = lambda shape: pl.BlockSpec(shape, lambda b, t: (0,) * len(shape))
    out_shapes = tuple(jax.ShapeDtypeStruct((B, HW, Cp), jnp.bfloat16) for _ in range(3))
    return pl.pallas_call(
        _norm_qkv_kernel,
        out_shape=out_shapes,
        grid_spec=pltpu.PrefetchScalarGridSpec(
            num_scalar_prefetch=0,
            grid=(B, nt),
            in_specs=[
                pl.BlockSpec((1, THW, Cp), lambda b, t: (b, t, 0)),   # x tile
                pl.BlockSpec((1, 1, Cp), lambda b, t: (b, 0, 0)),     # per-channel scale
                pl.BlockSpec((1, 1, Cp), lambda b, t: (b, 0, 0)),     # per-channel shift
                full((Cp, Cp)), full((Cp, Cp)), full((Cp, Cp)),       # wq, wk, wv
                full((1, Cp)), full((1, Cp)), full((1, Cp)),          # bq, bk, bv
            ],
            out_specs=tuple(pl.BlockSpec((1, THW, Cp), lambda b, t: (b, t, 0))
                            for _ in range(3)),
        ),
        compiler_params=pltpu.CompilerParams(
            dimension_semantics=("parallel", "parallel"),
            vmem_limit_bytes=VMEM_LIMIT,
        ),
    )(x_seq, scale_c, shift_c, prep["wq"], prep["wk"], prep["wv"],
      prep["bq"], prep["bk"], prep["bv"])


def _groupnorm_coeffs(x_nchw, prep):
    """Per-(batch, channel) GroupNorm scale/shift computed in XLA (two-pass variance)."""
    B, C, H, W = x_nchw.shape
    NG, cpg, Cp = prep["num_groups"], prep["cpg"], prep["Cp"]
    xg = x_nchw.reshape(B, NG, cpg * H * W)
    mean = jnp.mean(xg, axis=-1)                       # (B, NG)
    var = jnp.var(xg, axis=-1)                         # (B, NG), two-pass
    inv = lax.rsqrt(var + EPS)
    scale_c = jnp.repeat(inv, cpg, axis=1) * prep["gamma_raw"][None, :]     # (B, C)
    shift_c = prep["beta_raw"][None, :] - jnp.repeat(mean, cpg, axis=1) * scale_c
    if Cp != C:
        pad = ((0, 0), (0, Cp - C))
        scale_c = jnp.pad(scale_c, pad)
        shift_c = jnp.pad(shift_c, pad)
    return scale_c[:, None, :], shift_c[:, None, :]    # (B, 1, Cp) each


# --------------------------------------------------------------------------------------
# Path B, kernel 2a: attention with full-HW resident K/V (+ proj + residual)
# --------------------------------------------------------------------------------------
def _attn_resident_kernel(x_ref, q_ref, k_ref, v_ref, wp_ref, bp_ref, o_ref):
    s = lax.dot_general(q_ref[0], k_ref[0], (((1,), (1,)), ((), ())),
                        preferred_element_type=jnp.float32)        # (TQ, HW)
    m = jnp.max(s, axis=-1, keepdims=True)
    p = jnp.exp(s - m)
    l = jnp.sum(p, axis=-1, keepdims=True)
    out = jnp.dot(p.astype(jnp.bfloat16), v_ref[0],
                  preferred_element_type=jnp.float32)
    out = out * pl.reciprocal(l, approx=True)
    proj = jnp.dot(out.astype(jnp.bfloat16), wp_ref[...],
                   preferred_element_type=jnp.float32) + bp_ref[...]
    o_ref[0] = x_ref[0] + proj


def _attn_resident(x_seq, q, k, v, prep, TQ):
    B, HW, Cp = x_seq.shape
    nq = HW // TQ
    full = lambda shape: pl.BlockSpec(shape, lambda b, qi: (0,) * len(shape))
    return pl.pallas_call(
        _attn_resident_kernel,
        out_shape=jax.ShapeDtypeStruct((B, HW, Cp), jnp.float32),
        grid_spec=pltpu.PrefetchScalarGridSpec(
            num_scalar_prefetch=0,
            grid=(B, nq),
            in_specs=[
                pl.BlockSpec((1, TQ, Cp), lambda b, qi: (b, qi, 0)),   # x (residual)
                pl.BlockSpec((1, TQ, Cp), lambda b, qi: (b, qi, 0)),   # q tile
                pl.BlockSpec((1, HW, Cp), lambda b, qi: (b, 0, 0)),    # K resident per batch
                pl.BlockSpec((1, HW, Cp), lambda b, qi: (b, 0, 0)),    # V resident per batch
                full((Cp, Cp)), full((1, Cp)),                         # wp, bp
            ],
            out_specs=pl.BlockSpec((1, TQ, Cp), lambda b, qi: (b, qi, 0)),
        ),
        compiler_params=pltpu.CompilerParams(
            dimension_semantics=("parallel", "parallel"),
            vmem_limit_bytes=VMEM_LIMIT,
        ),
    )(x_seq, q, k, v, prep["wp"], prep["bp"])


# --------------------------------------------------------------------------------------
# Path B, kernel 2b: flash / online-softmax fallback for very large HW
# --------------------------------------------------------------------------------------
def _flash_kernel(x_ref, q_ref, k_ref, v_ref, wp_ref, bp_ref, o_ref,
                  m_sc, l_sc, acc_sc):
    ki = pl.program_id(2)

    @pl.when(ki == 0)
    def _():
        m_sc[...] = jnp.full_like(m_sc, -jnp.inf)
        l_sc[...] = jnp.zeros_like(l_sc)
        acc_sc[...] = jnp.zeros_like(acc_sc)

    s = lax.dot_general(q_ref[0], k_ref[0], (((1,), (1,)), ((), ())),
                        preferred_element_type=jnp.float32)        # (TQ, TK)
    m_prev = m_sc[...]
    m_new = jnp.maximum(m_prev, jnp.max(s, axis=-1, keepdims=True))
    alpha = jnp.exp(m_prev - m_new)
    p = jnp.exp(s - m_new)
    l_sc[...] = alpha * l_sc[...] + jnp.sum(p, axis=-1, keepdims=True)
    acc_sc[...] = alpha * acc_sc[...] + jnp.dot(
        p.astype(jnp.bfloat16), v_ref[0], preferred_element_type=jnp.float32)
    m_sc[...] = m_new

    @pl.when(ki == pl.num_programs(2) - 1)
    def _():
        out = acc_sc[...] * pl.reciprocal(l_sc[...], approx=True)
        proj = jnp.dot(out.astype(jnp.bfloat16), wp_ref[...],
                       preferred_element_type=jnp.float32) + bp_ref[...]
        o_ref[0] = x_ref[0] + proj


def _attn_flash(x_seq, q, k, v, prep, TQ, TK):
    B, HW, Cp = x_seq.shape
    nq, nk = HW // TQ, HW // TK
    full = lambda shape: pl.BlockSpec(shape, lambda b, qi, ki: (0,) * len(shape))
    return pl.pallas_call(
        _flash_kernel,
        out_shape=jax.ShapeDtypeStruct((B, HW, Cp), jnp.float32),
        grid_spec=pltpu.PrefetchScalarGridSpec(
            num_scalar_prefetch=0,
            grid=(B, nq, nk),
            in_specs=[
                pl.BlockSpec((1, TQ, Cp), lambda b, qi, ki: (b, qi, 0)),   # x (residual)
                pl.BlockSpec((1, TQ, Cp), lambda b, qi, ki: (b, qi, 0)),   # q tile
                pl.BlockSpec((1, TK, Cp), lambda b, qi, ki: (b, ki, 0)),   # k tile
                pl.BlockSpec((1, TK, Cp), lambda b, qi, ki: (b, ki, 0)),   # v tile
                full((Cp, Cp)), full((1, Cp)),                             # wp, bp
            ],
            out_specs=pl.BlockSpec((1, TQ, Cp), lambda b, qi, ki: (b, qi, 0)),
            scratch_shapes=[
                pltpu.VMEM((TQ, 1), jnp.float32),    # running max
                pltpu.VMEM((TQ, 1), jnp.float32),    # running sum
                pltpu.VMEM((TQ, Cp), jnp.float32),   # output accumulator
            ],
        ),
        compiler_params=pltpu.CompilerParams(
            dimension_semantics=("parallel", "parallel", "arbitrary"),
            vmem_limit_bytes=VMEM_LIMIT,
        ),
    )(x_seq, q, k, v, prep["wp"], prep["bp"])


def _attn_proj(x_seq, q, k, v, prep):
    B, HW, Cp = x_seq.shape
    TQ = _pick_tile(HW, DEFAULT_TQ)
    if _resident_vmem_estimate(HW, Cp, TQ) <= VMEM_PLAN:
        return _attn_resident(x_seq, q, k, v, prep, TQ)
    TK = _pick_tile(HW, 512)
    return _attn_flash(x_seq, q, k, v, prep, TQ, TK)


# --------------------------------------------------------------------------------------
# Top-level forward
# --------------------------------------------------------------------------------------
def attention_block(x_nchw, prep, path=None):
    """x_nchw: (B, C, H, W) float32. Returns (B, C, H, W). path in {None, 'fused', 'tiled'}."""
    B, C, H, W = x_nchw.shape
    HW = H * W
    Cp = prep["Cp"]
    # NCHW -> (B, HW, Cp) with zero channel padding to a lane-dense width (done in XLA).
    x_seq = jnp.transpose(x_nchw, (0, 2, 3, 1)).reshape(B, HW, C)
    if Cp != C:
        x_seq = jnp.pad(x_seq, ((0, 0), (0, 0), (0, Cp - C)))

    if path is None:
        path = "fused" if _fused_vmem_estimate(HW, Cp) <= VMEM_PLAN else "tiled"

    if path == "fused":
        o_seq = _fused_attention(x_seq, prep)
    else:
        scale_c, shift_c = _groupnorm_coeffs(x_nchw, prep)
        q, k, v = _norm_qkv_tiled(x_seq, scale_c, shift_c, prep)
        o_seq = _attn_proj(x_seq, q, k, v, prep)

    o_seq = o_seq[:, :, :C]
    return jnp.transpose(o_seq.reshape(B, H, W, C), (0, 3, 1, 2))


# --------------------------------------------------------------------------------------
# Parameters (PyTorch-equivalent) and one-time host-side preparation
# --------------------------------------------------------------------------------------
def make_params(key, C, num_groups=NUM_GROUPS):
    ks = jax.random.split(key, 8)
    gamma = jnp.ones((C,), jnp.float32) + 0.1 * jax.random.normal(ks[0], (C,))
    beta = 0.1 * jax.random.normal(ks[1], (C,))
    scale = 1.0 / math.sqrt(C)
    wq = scale * jax.random.normal(ks[2], (C, C), jnp.float32)
    wk = scale * jax.random.normal(ks[3], (C, C), jnp.float32)
    wv = scale * jax.random.normal(ks[4], (C, C), jnp.float32)
    wp = scale * jax.random.normal(ks[5], (C, C), jnp.float32)
    bq = 0.01 * jax.random.normal(ks[6], (C,), jnp.float32)
    bk = jnp.zeros((C,), jnp.float32)
    bv = 0.01 * jax.random.normal(ks[7], (C,), jnp.float32)
    bp = jnp.zeros((C,), jnp.float32)
    return (gamma, beta, wq, bq, wk, bk, wv, bv, wp, bp)


def prepare_params(params, C, num_groups=NUM_GROUPS):
    """Pad channels to 128 lanes, fold softmax scale into wq/bq, pre-cast weights to bf16."""
    gamma, beta, wq, bq, wk, bk, wv, bv, wp, bp = params
    assert C % num_groups == 0
    Cp = max(LANE, ((C + LANE - 1) // LANE) * LANE)
    cpg = C // num_groups
    scale = 1.0 / math.sqrt(C)            # folded into the q projection
    wq, bq = wq * scale, bq * scale

    def pad_w(w):
        return jnp.zeros((Cp, Cp), jnp.float32).at[:C, :C].set(w)

    def pad_v(v):
        return jnp.zeros((1, Cp), jnp.float32).at[0, :C].set(v)

    g_fwd = jnp.zeros((Cp, num_groups), jnp.float32).at[
        jnp.arange(C), jnp.arange(C) // cpg].set(1.0)
    return dict(
        C=C, Cp=Cp, cpg=cpg, num_groups=num_groups,
        g_fwd=g_fwd, g_bwd=jnp.asarray(g_fwd.T),
        gamma=pad_v(gamma), beta=pad_v(beta),
        gamma_raw=gamma, beta_raw=beta,
        wq=pad_w(wq).astype(jnp.bfloat16), wk=pad_w(wk).astype(jnp.bfloat16),
        wv=pad_w(wv).astype(jnp.bfloat16), wp=pad_w(wp).astype(jnp.bfloat16),
        bq=pad_v(bq), bk=pad_v(bk), bv=pad_v(bv), bp=pad_v(bp),
    )


# --------------------------------------------------------------------------------------
# Pure-JAX reference mirroring the PyTorch forward (for correctness check)
# --------------------------------------------------------------------------------------
def attention_block_ref(x_nchw, params, num_groups=NUM_GROUPS):
    gamma, beta, wq, bq, wk, bk, wv, bv, wp, bp = params
    B, C, H, W = x_nchw.shape
    xg = x_nchw.reshape(B, num_groups, C // num_groups, H, W)
    mean = jnp.mean(xg, axis=(2, 3, 4), keepdims=True)
    var = jnp.mean((xg - mean) ** 2, axis=(2, 3, 4), keepdims=True)
    xn = ((xg - mean) / jnp.sqrt(var + EPS)).reshape(B, C, H, W)
    xn = xn * gamma.reshape(1, C, 1, 1) + beta.reshape(1, C, 1, 1)
    xs = jnp.transpose(xn, (0, 2, 3, 1)).reshape(B, H * W, C)
    q = xs @ wq + bq
    k = xs @ wk + bk
    v = xs @ wv + bv
    attn = jax.nn.softmax(jnp.einsum("bqc,bkc->bqk", q, k) / math.sqrt(C), axis=-1)
    out = jnp.einsum("bqk,bkc->bqc", attn, v)
    proj = out @ wp + bp
    res = jnp.transpose(x_nchw, (0, 2, 3, 1)).reshape(B, H * W, C) + proj
    return jnp.transpose(res.reshape(B, H, W, C), (0, 3, 1, 2))


if __name__ == "__main__":
    key = jax.random.PRNGKey(0)
    kx, kp, kx2 = jax.random.split(key, 3)

    # GroupNorm(16, ch) requires ch % 16 == 0.
    B, C, H, W = 2, 32, 8, 8
    x = jax.random.normal(kx, (B, C, H, W), jnp.float32)
    params = make_params(kp, C)
    prep = prepare_params(params, C)

    # Small shape -> fully fused single-kernel path (auto-selected).
    y = jax.block_until_ready(attention_block(x, prep))
    y_ref = attention_block_ref(x, params)
    assert y.shape == (B, C, H, W)
    # bf16 matmul operands (f32 accumulation) + approx reciprocal -> loosened tolerance.
    assert jnp.allclose(y, y_ref, atol=5e-2, rtol=5e-2), "fused path mismatch vs reference"

    # Larger spatial extent, forced onto the tiled two-kernel path
    # (HW-tiled normalize+QKV, then resident-K/V attention + proj + residual).
    B2, C2, H2, W2 = 1, 32, 16, 16
    x2 = jax.random.normal(kx2, (B2, C2, H2, W2), jnp.float32)
    y2 = jax.block_until_ready(attention_block(x2, prep, path="tiled"))
    y2_ref = attention_block_ref(x2, params)
    assert y2.shape == (B2, C2, H2, W2)
    assert jnp.allclose(y2, y2_ref, atol=5e-2, rtol=5e-2), "tiled path mismatch vs reference"

    print("KERNEL_OK")
</pallas_src>

<mosaic_0001>
module attributes {stable_mosaic.version = 11 : i64} {
  func.func @_fused_kernel(%arg0: i32, %arg1: memref<1x64x128xf32, #tpu.memory_space<vmem>>, %arg2: memref<128x16xf32, #tpu.memory_space<vmem>>, %arg3: memref<16x128xf32, #tpu.memory_space<vmem>>, %arg4: memref<1x128xf32, #tpu.memory_space<vmem>>, %arg5: memref<1x128xf32, #tpu.memory_space<vmem>>, %arg6: memref<128x128xbf16, #tpu.memory_space<vmem>>, %arg7: memref<128x128xbf16, #tpu.memory_space<vmem>>, %arg8: memref<128x128xbf16, #tpu.memory_space<vmem>>, %arg9: memref<1x128xf32, #tpu.memory_space<vmem>>, %arg10: memref<1x128xf32, #tpu.memory_space<vmem>>, %arg11: memref<1x128xf32, #tpu.memory_space<vmem>>, %arg12: memref<128x128xbf16, #tpu.memory_space<vmem>>, %arg13: memref<1x128xf32, #tpu.memory_space<vmem>>, %arg14: memref<1x64x128xf32, #tpu.memory_space<vmem>>) attributes {dimension_semantics = [#tpu.dimension_semantics<parallel>], iteration_bounds = array<i64: 2>, scalar_prefetch = 0 : i64, scratch_operands = 0 : i64, tpu.core_type = #tpu.core_type<tc>, window_params = [{transform_indices = @transform_0, window_bounds = array<i64: 1, 64, 128>}, {pipeline_mode = #tpu.pipeline_mode<synchronous>, transform_indices = @transform_1, window_bounds = array<i64: 128, 16>}, {pipeline_mode = #tpu.pipeline_mode<synchronous>, transform_indices = @transform_2, window_bounds = array<i64: 16, 128>}, {pipeline_mode = #tpu.pipeline_mode<synchronous>, transform_indices = @transform_3, window_bounds = array<i64: 1, 128>}, {pipeline_mode = #tpu.pipeline_mode<synchronous>, transform_indices = @transform_4, window_bounds = array<i64: 1, 128>}, {pipeline_mode = #tpu.pipeline_mode<synchronous>, transform_indices = @transform_5, window_bounds = array<i64: 128, 128>}, {pipeline_mode = #tpu.pipeline_mode<synchronous>, transform_indices = @transform_6, window_bounds = array<i64: 128, 128>}, {pipeline_mode = #tpu.pipeline_mode<synchronous>, transform_indices = @transform_7, window_bounds = array<i64: 128, 128>}, {pipeline_mode = #tpu.pipeline_mode<synchronous>, transform_indices = @transform_8, window_bounds = array<i64: 1, 128>}, {pipeline_mode = #tpu.pipeline_mode<synchronous>, transform_indices = @transform_9, window_bounds = array<i64: 1, 128>}, {pipeline_mode = #tpu.pipeline_mode<synchronous>, transform_indices = @transform_10, window_bounds = array<i64: 1, 128>}, {pipeline_mode = #tpu.pipeline_mode<synchronous>, transform_indices = @transform_11, window_bounds = array<i64: 128, 128>}, {pipeline_mode = #tpu.pipeline_mode<synchronous>, transform_indices = @transform_12, window_bounds = array<i64: 1, 128>}, {transform_indices = @transform_13, window_bounds = array<i64: 1, 64, 128>}]} {
    %c0 = arith.constant 0 : index
    %c0_0 = arith.constant 0 : index
    %c0_1 = arith.constant 0 : index
    %0 = vector.load %arg1[%c0, %c0_0, %c0_1] : memref<1x64x128xf32, #tpu.memory_space<vmem>>, vector<1x64x128xf32>
    %1 = vector.shape_cast %0 : vector<1x64x128xf32> to vector<64x128xf32>
    %c0_2 = arith.constant 0 : index
    %c0_3 = arith.constant 0 : index
    %2 = vector.load %arg2[%c0_2, %c0_3] : memref<128x16xf32, #tpu.memory_space<vmem>>, vector<128x16xf32>
    %c0_4 = arith.constant 0 : index
    %c0_5 = arith.constant 0 : index
    %3 = vector.load %arg3[%c0_4, %c0_5] : memref<16x128xf32, #tpu.memory_space<vmem>>, vector<16x128xf32>
    %cst = arith.constant dense<0.000000e+00> : vector<128xf32>
    %4 = vector.multi_reduction <add>, %1, %cst [0] : vector<64x128xf32> to vector<128xf32>
    %5 = vector.shape_cast %4 : vector<128xf32> to vector<1x128xf32>
    %cst_6 = arith.constant 6.400000e+01 : f32
    %6 = vector.broadcast %cst_6 : f32 to vector<1x128xf32>
    %7 = arith.divf %5, %6 : vector<1x128xf32>
    %cst_7 = arith.constant dense<0.000000e+00> : vector<1x16xf32>
    %8 = tpu.matmul %7, %2, %cst_7 {dimension_numbers = #tpu.dot_dimension_numbers<[1], [0], [0], [1], [0, 0, 1, 1], [], []>} : vector<1x128xf32>, vector<128x16xf32>, vector<1x16xf32> -> vector<1x16xf32>
    %cst_8 = arith.constant 5.000000e-01 : f32
    %9 = vector.broadcast %cst_8 : f32 to vector<1x16xf32>
    %10 = arith.mulf %8, %9 : vector<1x16xf32>
    %cst_9 = arith.constant dense<0.000000e+00> : vector<1x128xf32>
    %11 = tpu.matmul %10, %3, %cst_9 {dimension_numbers = #tpu.dot_dimension_numbers<[1], [0], [0], [1], [0, 0, 1, 1], [], []>} : vector<1x16xf32>, vector<16x128xf32>, vector<1x128xf32> -> vector<1x128xf32>
    %12 = vector.broadcast %11 : vector<1x128xf32> to vector<64x128xf32>
    %13 = arith.subf %1, %12 : vector<64x128xf32>
    %14 = arith.mulf %13, %13 : vector<64x128xf32>
    %cst_10 = arith.constant dense<0.000000e+00> : vector<128xf32>
    %15 = vector.multi_reduction <add>, %14, %cst_10 [0] : vector<64x128xf32> to vector<128xf32>
    %16 = vector.shape_cast %15 : vector<128xf32> to vector<1x128xf32>
    %cst_11 = arith.constant 6.400000e+01 : f32
    %17 = vector.broadcast %cst_11 : f32 to vector<1x128xf32>
    %18 = arith.divf %16, %17 : vector<1x128xf32>
    %cst_12 = arith.constant dense<0.000000e+00> : vector<1x16xf32>
    %19 = tpu.matmul %18, %2, %cst_12 {dimension_numbers = #tpu.dot_dimension_numbers<[1], [0], [0], [1], [0, 0, 1, 1], [], []>} : vector<1x128xf32>, vector<128x16xf32>, vector<1x16xf32> -> vector<1x16xf32>
    %cst_13 = arith.constant 5.000000e-01 : f32
    %20 = vector.broadcast %cst_13 : f32 to vector<1x16xf32>
    %21 = arith.mulf %19, %20 : vector<1x16xf32>
    %cst_14 = arith.constant dense<0.000000e+00> : vector<1x128xf32>
    %22 = tpu.matmul %21, %3, %cst_14 {dimension_numbers = #tpu.dot_dimension_numbers<[1], [0], [0], [1], [0, 0, 1, 1], [], []>} : vector<1x16xf32>, vector<16x128xf32>, vector<1x128xf32> -> vector<1x128xf32>
    %cst_15 = arith.constant 9.99999974E-6 : f32
    %23 = vector.broadcast %cst_15 : f32 to vector<1x128xf32>
    %24 = arith.addf %22, %23 : vector<1x128xf32>
    %25 = math.rsqrt %24 : vector<1x128xf32>
    %c0_16 = arith.constant 0 : index
    %c0_17 = arith.constant 0 : index
    %26 = vector.load %arg4[%c0_16, %c0_17] : memref<1x128xf32, #tpu.memory_space<vmem>>, vector<1x128xf32>
    %27 = arith.mulf %25, %26 : vector<1x128xf32>
    %c0_18 = arith.constant 0 : index
    %c0_19 = arith.constant 0 : index
    %28 = vector.load %arg5[%c0_18, %c0_19] : memref<1x128xf32, #tpu.memory_space<vmem>>, vector<1x128xf32>
    %29 = arith.mulf %11, %27 : vector<1x128xf32>
    %30 = arith.subf %28, %29 : vector<1x128xf32>
    %31 = vector.broadcast %27 : vector<1x128xf32> to vector<64x128xf32>
    %32 = arith.mulf %1, %31 : vector<64x128xf32>
    %33 = vector.broadcast %30 : vector<1x128xf32> to vector<64x128xf32>
    %34 = arith.addf %32, %33 : vector<64x128xf32>
    %35 = arith.truncf %34 : vector<64x128xf32> to vector<64x128xbf16>
    %c0_20 = arith.constant 0 : index
    %c0_21 = arith.constant 0 : index
    %36 = vector.load %arg6[%c0_20, %c0_21] : memref<128x128xbf16, #tpu.memory_space<vmem>>, vector<128x128xbf16>
    %cst_22 = arith.constant dense<0.000000e+00> : vector<64x128xf32>
    %37 = tpu.matmul %35, %36, %cst_22 {dimension_numbers = #tpu.dot_dimension_numbers<[1], [0], [0], [1], [0, 0, 1, 1], [], []>} : vector<64x128xbf16>, vector<128x128xbf16>, vector<64x128xf32> -> vector<64x128xf32>
    %c0_23 = arith.constant 0 : index
    %c0_24 = arith.constant 0 : index
    %38 = vector.load %arg9[%c0_23, %c0_24] : memref<1x128xf32, #tpu.memory_space<vmem>>, vector<1x128xf32>
    %39 = vector.broadcast %38 : vector<1x128xf32> to vector<64x128xf32>
    %40 = arith.addf %37, %39 : vector<64x128xf32>
    %41 = arith.truncf %40 : vector<64x128xf32> to vector<64x128xbf16>
    %c0_25 = arith.constant 0 : index
    %c0_26 = arith.constant 0 : index
    %42 = vector.load %arg7[%c0_25, %c0_26] : memref<128x128xbf16, #tpu.memory_space<vmem>>, vector<128x128xbf16>
    %cst_27 = arith.constant dense<0.000000e+00> : vector<64x128xf32>
    %43 = tpu.matmul %35, %42, %cst_27 {dimension_numbers = #tpu.dot_dimension_numbers<[1], [0], [0], [1], [0, 0, 1, 1], [], []>} : vector<64x128xbf16>, vector<128x128xbf16>, vector<64x128xf32> -> vector<64x128xf32>
    %c0_28 = arith.constant 0 : index
    %c0_29 = arith.constant 0 : index
    %44 = vector.load %arg10[%c0_28, %c0_29] : memref<1x128xf32, #tpu.memory_space<vmem>>, vector<1x128xf32>
    %45 = vector.broadcast %44 : vector<1x128xf32> to vector<64x128xf32>
    %46 = arith.addf %43, %45 : vector<64x128xf32>
    %47 = arith.truncf %46 : vector<64x128xf32> to vector<64x128xbf16>
    %c0_30 = arith.constant 0 : index
    %c0_31 = arith.constant 0 : index
    %48 = vector.load %arg8[%c0_30, %c0_31] : memref<128x128xbf16, #tpu.memory_space<vmem>>, vector<128x128xbf16>
    %cst_32 = arith.constant dense<0.000000e+00> : vector<64x128xf32>
    %49 = tpu.matmul %35, %48, %cst_32 {dimension_numbers = #tpu.dot_dimension_numbers<[1], [0], [0], [1], [0, 0, 1, 1], [], []>} : vector<64x128xbf16>, vector<128x128xbf16>, vector<64x128xf32> -> vector<64x128xf32>
    %c0_33 = arith.constant 0 : index
    %c0_34 = arith.constant 0 : index
    %50 = vector.load %arg11[%c0_33, %c0_34] : memref<1x128xf32, #tpu.memory_space<vmem>>, vector<1x128xf32>
    %51 = vector.broadcast %50 : vector<1x128xf32> to vector<64x128xf32>
    %52 = arith.addf %49, %51 : vector<64x128xf32>
    %53 = arith.truncf %52 : vector<64x128xf32> to vector<64x128xbf16>
    %cst_35 = arith.constant dense<0.000000e+00> : vector<64x64xf32>
    %54 = tpu.matmul %41, %47, %cst_35 {dimension_numbers = #tpu.dot_dimension_numbers<[1], [1], [0], [0], [0, 0, 1, 0], [], []>} : vector<64x128xbf16>, vector<64x128xbf16>, vector<64x64xf32> -> vector<64x64xf32>
    %cst_36 = arith.constant dense<0xFF800000> : vector<64xf32>
    %55 = vector.multi_reduction <maximumf>, %54, %cst_36 [1] : vector<64x64xf32> to vector<64xf32>
    %56 = vector.shape_cast %55 : vector<64xf32> to vector<64x1xf32>
    %57 = vector.broadcast %56 : vector<64x1xf32> to vector<64x64xf32>
    %58 = arith.subf %54, %57 : vector<64x64xf32>
    %59 = math.exp %58 : vector<64x64xf32>
    %cst_37 = arith.constant dense<0.000000e+00> : vector<64xf32>
    %60 = vector.multi_reduction <add>, %59, %cst_37 [1] : vector<64x64xf32> to vector<64xf32>
    %61 = vector.shape_cast %60 : vector<64xf32> to vector<64x1xf32>
    %62 = arith.truncf %59 : vector<64x64xf32> to vector<64x64xbf16>
    %cst_38 = arith.constant dense<0.000000e+00> : vector<64x128xf32>
    %63 = tpu.matmul %62, %53, %cst_38 {dimension_numbers = #tpu.dot_dimension_numbers<[1], [0], [0], [1], [0, 0, 1, 1], [], []>} : vector<64x64xbf16>, vector<64x128xbf16>, vector<64x128xf32> -> vector<64x128xf32>
    %64 = tpu.reciprocal %61 {approx = true} : vector<64x1xf32> -> vector<64x1xf32>
    %65 = vector.broadcast %64 : vector<64x1xf32> to vector<64x128xf32>
    %66 = arith.mulf %63, %65 : vector<64x128xf32>
    %67 = arith.truncf %66 : vector<64x128xf32> to vector<64x128xbf16>
    %c0_39 = arith.constant 0 : index
    %c0_40 = arith.constant 0 : index
    %68 = vector.load %arg12[%c0_39, %c0_40] : memref<128x128xbf16, #tpu.memory_space<vmem>>, vector<128x128xbf16>
    %cst_41 = arith.constant dense<0.000000e+00> : vector<64x128xf32>
    %69 = tpu.matmul %67, %68, %cst_41 {dimension_numbers = #tpu.dot_dimension_numbers<[1], [0], [0], [1], [0, 0, 1, 1], [], []>} : vector<64x128xbf16>, vector<128x128xbf16>, vector<64x128xf32> -> vector<64x128xf32>
    %c0_42 = arith.constant 0 : index
    %c0_43 = arith.constant 0 : index
    %70 = vector.load %arg13[%c0_42, %c0_43] : memref<1x128xf32, #tpu.memory_space<vmem>>, vector<1x128xf32>
    %71 = vector.broadcast %70 : vector<1x128xf32> to vector<64x128xf32>
    %72 = arith.addf %69, %71 : vector<64x128xf32>
    %73 = arith.addf %1, %72 : vector<64x128xf32>
    %c0_44 = arith.constant 0 : index
    %c0_45 = arith.constant 0 : index
    %c0_46 = arith.constant 0 : index
    %74 = vector.load %arg14[%c0_44, %c0_45, %c0_46] : memref<1x64x128xf32, #tpu.memory_space<vmem>>, vector<1x64x128xf32>
    %75 = vector.shape_cast %74 : vector<1x64x128xf32> to vector<64x128xf32>
    %76 = vector.shape_cast %73 : vector<64x128xf32> to vector<1x64x128xf32>
    tpu.vector_store %arg14[%c0_44, %c0_45, %c0_46], %76 {strides = array<i32>} : memref<1x64x128xf32, #tpu.memory_space<vmem>>, vector<1x64x128xf32>,
    return
  }
  func.func @transform_0(%arg0: i32) -> (i32, i32, i32) {
    %c0_i32 = arith.constant 0 : i32
    %c0_i32_0 = arith.constant 0 : i32
    %c0_i32_1 = arith.constant 0 : i32
    return %arg0, %c0_i32, %c0_i32_0 : i32, i32, i32
  }
  func.func @transform_1(%arg0: i32) -> (i32, i32) {
    %c0_i32 = arith.constant 0 : i32
    %c0_i32_0 = arith.constant 0 : i32
    %c0_i32_1 = arith.constant 0 : i32
    return %c0_i32, %c0_i32_0 : i32, i32
  }
  func.func @transform_2(%arg0: i32) -> (i32, i32) {
    %c0_i32 = arith.constant 0 : i32
    %c0_i32_0 = arith.constant 0 : i32
    %c0_i32_1 = arith.constant 0 : i32
    return %c0_i32, %c0_i32_0 : i32, i32
  }
  func.func @transform_3(%arg0: i32) -> (i32, i32) {
    %c0_i32 = arith.constant 0 : i32
    %c0_i32_0 = arith.constant 0 : i32
    %c0_i32_1 = arith.constant 0 : i32
    return %c0_i32, %c0_i32_0 : i32, i32
  }
  func.func @transform_4(%arg0: i32) -> (i32, i32) {
    %c0_i32 = arith.constant 0 : i32
    %c0_i32_0 = arith.constant 0 : i32
    %c0_i32_1 = arith.constant 0 : i32
    return %c0_i32, %c0_i32_0 : i32, i32
  }
  func.func @transform_5(%arg0: i32) -> (i32, i32) {
    %c0_i32 = arith.constant 0 : i32
    %c0_i32_0 = arith.constant 0 : i32
    %c0_i32_1 = arith.constant 0 : i32
    return %c0_i32, %c0_i32_0 : i32, i32
  }
  func.func @transform_6(%arg0: i32) -> (i32, i32) {
    %c0_i32 = arith.constant 0 : i32
    %c0_i32_0 = arith.constant 0 : i32
    %c0_i32_1 = arith.constant 0 : i32
    return %c0_i32, %c0_i32_0 : i32, i32
  }
  func.func @transform_7(%arg0: i32) -> (i32, i32) {
    %c0_i32 = arith.constant 0 : i32
    %c0_i32_0 = arith.constant 0 : i32
    %c0_i32_1 = arith.constant 0 : i32
    return %c0_i32, %c0_i32_0 : i32, i32
  }
  func.func @transform_8(%arg0: i32) -> (i32, i32) {
    %c0_i32 = arith.constant 0 : i32
    %c0_i32_0 = arith.constant 0 : i32
    %c0_i32_1 = arith.constant 0 : i32
    return %c0_i32, %c0_i32_0 : i32, i32
  }
  func.func @transform_9(%arg0: i32) -> (i32, i32) {
    %c0_i32 = arith.constant 0 : i32
    %c0_i32_0 = arith.constant 0 : i32
    %c0_i32_1 = arith.constant 0 : i32
    return %c0_i32, %c0_i32_0 : i32, i32
  }
  func.func @transform_10(%arg0: i32) -> (i32, i32) {
    %c0_i32 = arith.constant 0 : i32
    %c0_i32_0 = arith.constant 0 : i32
    %c0_i32_1 = arith.constant 0 : i32
    return %c0_i32, %c0_i32_0 : i32, i32
  }
  func.func @transform_11(%arg0: i32) -> (i32, i32) {
    %c0_i32 = arith.constant 0 : i32
    %c0_i32_0 = arith.constant 0 : i32
    %c0_i32_1 = arith.constant 0 : i32
    return %c0_i32, %c0_i32_0 : i32, i32
  }
  func.func @transform_12(%arg0: i32) -> (i32, i32) {
    %c0_i32 = arith.constant 0 : i32
    %c0_i32_0 = arith.constant 0 : i32
    %c0_i32_1 = arith.constant 0 : i32
    return %c0_i32, %c0_i32_0 : i32, i32
  }
  func.func @transform_13(%arg0: i32) -> (i32, i32, i32) {
    %c0_i32 = arith.constant 0 : i32
    %c0_i32_0 = arith.constant 0 : i32
    %c0_i32_1 = arith.constant 0 : i32
    return %arg0, %c0_i32, %c0_i32_0 : i32, i32, i32
  }
}

</mosaic_0001>

<llo_original>
// kernel: tpu_custom_call.1
$region0: #{tpu_custom_call.1}
  #allocation0 [shape = 'u32[]', space=smem, size = 0x4, offset = 0x4, fixed_abs, tag = 'smem constant byte address 0x4 - core index']
  #allocation1 [shape = 'u32[144,128]{1,0:T(1,128)}', space=vmem, size = 0x12000, scoped, tag = 'internal scratch']
  %s0 = inlined_call_operand.vmem [shape: f32[2,64,128], index: 0, kind: input, shape index: {}]
  %s1 = inlined_call_operand.vmem [shape: f32[128,16], index: 1, kind: input, shape index: {}]
  %s2 = inlined_call_operand.vmem [shape: f32[16,128], index: 2, kind: input, shape index: {}]
  %s3 = inlined_call_operand.vmem [shape: f32[1,128], index: 3, kind: input, shape index: {}]
  %s4 = inlined_call_operand.vmem [shape: f32[1,128], index: 4, kind: input, shape index: {}]
  %s5 = inlined_call_operand.hbm [shape: bf16[128,128], index: 5, kind: input, shape index: {}]
  %s6 = inlined_call_operand.hbm [shape: bf16[128,128], index: 6, kind: input, shape index: {}]
  %s7 = inlined_call_operand.hbm [shape: bf16[128,128], index: 7, kind: input, shape index: {}]
  %s8 = inlined_call_operand.vmem [shape: f32[1,128], index: 8, kind: input, shape index: {}]
  %s9 = inlined_call_operand.vmem [shape: f32[1,128], index: 9, kind: input, shape index: {}]
  %s10 = inlined_call_operand.vmem [shape: f32[1,128], index: 10, kind: input, shape index: {}]
  %s11 = inlined_call_operand.hbm [shape: bf16[128,128], index: 11, kind: input, shape index: {}]
  %s12 = inlined_call_operand.vmem [shape: f32[1,128], index: 12, kind: input, shape index: {}]
  %s13 = inlined_call_operand.hbm [shape: f32[2,64,128], index: 13, kind: output, shape index: {}]
  %s14 = sld [smem:[#allocation0]]
  $region101: #{tpu_custom_call.1} parent=0
    _
  %s16 = ssub.s32 1, %s14
  %s17 = scalar_select 0, %s16, %s14
  $region1: #{tpu_custom_call.1} parent=0
    #allocation2 [shape = 'u8[32768]{0}', space=vmem, size = 0x8000, scoped, tag = 'input window, operand 5, single buffered']
    #allocation3 [shape = 's32[2]{0}', space=sflag, size = 0x8, scoped, tag = 'scoped memory for tpu_custom_call.1']
    #allocation4 [shape = 's32[2]{0}', space=sflag, size = 0x8, scoped, tag = 'scoped memory for tpu_custom_call.1']
    #allocation5 [shape = 'u8[32768]{0}', space=vmem, size = 0x8000, scoped, tag = 'input window, operand 6, single buffered']
    #allocation6 [shape = 's32[1]{0}', space=sflag, size = 0x4, scoped, tag = 'scoped memory for tpu_custom_call.1']
    #allocation7 [shape = 'u8[32768]{0}', space=vmem, size = 0x8000, scoped, tag = 'input window, operand 7, single buffered']
    #allocation8 [shape = 'u8[32768]{0}', space=vmem, size = 0x8000, scoped, tag = 'input window, operand 11, single buffered']
    #allocation9 [shape = 's32[1]{0}', space=sflag, size = 0x4, scoped, tag = 'scoped memory for tpu_custom_call.1']
    #allocation10 [shape = 'u8[65536]{0}', space=vmem, size = 0x10000, scoped, tag = 'output window, operand 0']
    %18 = vsyncpa [#allocation3], 0
    %19 = vsyncpa [#allocation6], 0
    %20 = vsyncpa [#allocation9], 0
    %21 = vsyncpa [#allocation4], 0
    %s22 = scalar_lea.sflag [#allocation4], 1
    %23 = vsyncpa %s22, 0
    loop: start=0, step=1, limit=4
    $region2: #{tpu_custom_call.1} parent=1 // loop_pre_header
      _
    $region3: #{tpu_custom_call.1} parent=1 // loop_header
      %s25 = sphi 0, %s29
      %p26 = scmp.ge.s32.totalorder %s25, 4
      %s35 = sphi 0, %s37
      %s38 = sphi 0, %s35
      %s39 = sphi 0, %s38
      %s55 = sphi 0, %s39
      %s59 = sphi 0, %s59
      %s61 = sphi 0, %s59
      %s62 = sphi 0, %s61
      %s76 = sphi 0, %s62
      %s80 = sphi 0, %s80
      %s82 = sphi 0, %s80
      %s83 = sphi 0, %s82
      %s97 = sphi 0, %s83
      %s101 = sphi 0, %s101
      %s103 = sphi 0, %s101
      %s104 = sphi 0, %s103
      %s118 = sphi 0, %s104
      %s122 = sphi 0, %s122
      %s124 = sphi 0, %s122
      %s125 = sphi 0, %s124
      %s139 = sphi 0, %s125
      %s143 = sphi 0, %s143
      %s145 = sphi 0, %s143
      %s146 = sphi 0, %s145
      %s160 = sphi 0, %s146
      %s164 = sphi 0, %s164
      %s166 = sphi 0, %s164
      %s167 = sphi 0, %s166
      %s181 = sphi 0, %s167
      %s185 = sphi 0, %s185
      %s187 = sphi 0, %s185
      %s188 = sphi 0, %s187
      %s202 = sphi 0, %s188
      %s206 = sphi 0, %s206
      %s208 = sphi 0, %s206
      %s209 = sphi 0, %s208
      %s223 = sphi 0, %s209
      %s227 = sphi 0, %s227
      %s229 = sphi 0, %s227
      %s230 = sphi 0, %s229
      %s244 = sphi 0, %s230
      %s248 = sphi 0, %s248
      %s250 = sphi 0, %s248
      %s251 = sphi 0, %s250
      %s265 = sphi 0, %s251
      %s269 = sphi 0, %s269
      %s271 = sphi 0, %s269
      %s272 = sphi 0, %s271
      %s286 = sphi 0, %s272
      %s290 = sphi 0, %s290
      %s292 = sphi 0, %s290
      %s293 = sphi 0, %s292
      %s307 = sphi 0, %s293
      %s313 = sphi 0, %s315
      %s316 = sphi 0, %s313
      %s317 = sphi 0, %s316
      %s333 = sphi 0, %s317
    $region4: #{tpu_custom_call.1} parent=1 // loop_header_branch
      %28 = sbr.rel (%p26) target = $region8
    $region5: #{tpu_custom_call.1} parent=1 // loop_body
      %s30 = ssub.s32 %s25, 1
      %s31 = ssub.s32 %s25, 2
      %s32 = sadd.s32 %s25, 1
      %s33 = ssub.s32 %s25, %s32
      %p34 = scmp.eq.s32.totalorder %s33, 0
      %s36 = sadd.s32 %s35, 1
      %s37 = scalar_select %p34, %s35, %s36
      %p40 = pneg %p34
      %p41 = scmp.eq.s32.totalorder %s25, 1
      %p42 = por %p40, %p41
      %p43 = scmp.ne.s32.totalorder %s35, %s38
      %p44 = scmp.eq.s32.totalorder %s25, 0
      %p45 = por %p43, %p44
      %p46 = scmp.ne.s32.totalorder %s35, %s38
      %p47 = scmp.eq.s32.totalorder %s30, 1
      %p48 = por %p46, %p47
      %p49 = scmp.ne.s32.totalorder %s38, %s39
      %p50 = scmp.eq.s32.totalorder %s30, 0
      %p51 = por %p49, %p50
      %p52 = scmp.ne.s32.totalorder %s38, %s39
      %p53 = scmp.eq.s32.totalorder %s31, 1
      %p54 = por %p52, %p53
      %p56 = scmp.ne.s32.totalorder %s39, %s55
      %p57 = scmp.eq.s32.totalorder %s31, 0
      %p58 = por %p56, %p57
      %s60 = sadd.s32 %s59, 1
      %p63 = scmp.eq.s32.totalorder %s25, 1
      %p64 = scmp.ne.s32.totalorder %s59, %s61
      %p65 = scmp.eq.s32.totalorder %s25, 0
      %p66 = por %p64, %p65
      %p67 = scmp.ne.s32.totalorder %s59, %s61
      %p68 = scmp.eq.s32.totalorder %s30, 1
      %p69 = por %p67, %p68
      %p70 = scmp.ne.s32.totalorder %s61, %s62
      %p71 = scmp.eq.s32.totalorder %s30, 0
      %p72 = por %p70, %p71
      %p73 = scmp.ne.s32.totalorder %s61, %s62
      %p74 = scmp.eq.s32.totalorder %s31, 1
      %p75 = por %p73, %p74
      %p77 = scmp.ne.s32.totalorder %s62, %s76
      %p78 = scmp.eq.s32.totalorder %s31, 0
      %p79 = por %p77, %p78
      %s81 = sadd.s32 %s80, 1
      %p84 = scmp.eq.s32.totalorder %s25, 1
      %p85 = scmp.ne.s32.totalorder %s80, %s82
      %p86 = scmp.eq.s32.totalorder %s25, 0
      %p87 = por %p85, %p86
      %p88 = scmp.ne.s32.totalorder %s80, %s82
      %p89 = scmp.eq.s32.totalorder %s30, 1
      %p90 = por %p88, %p89
      %p91 = scmp.ne.s32.totalorder %s82, %s83
      %p92 = scmp.eq.s32.totalorder %s30, 0
      %p93 = por %p91, %p92
      %p94 = scmp.ne.s32.totalorder %s82, %s83
      %p95 = scmp.eq.s32.totalorder %s31, 1
      %p96 = por %p94, %p95
      %p98 = scmp.ne.s32.totalorder %s83, %s97
      %p99 = scmp.eq.s32.totalorder %s31, 0
      %p100 = por %p98, %p99
      %s102 = sadd.s32 %s101, 1
      %p105 = scmp.eq.s32.totalorder %s25, 1
      %p106 = scmp.ne.s32.totalorder %s101, %s103
      %p107 = scmp.eq.s32.totalorder %s25, 0
      %p108 = por %p106, %p107
      %p109 = scmp.ne.s32.totalorder %s101, %s103
      %p110 = scmp.eq.s32.totalorder %s30, 1
      %p111 = por %p109, %p110
      %p112 = scmp.ne.s32.totalorder %s103, %s104
      %p113 = scmp.eq.s32.totalorder %s30, 0
      %p114 = por %p112, %p113
      %p115 = scmp.ne.s32.totalorder %s103, %s104
      %p116 = scmp.eq.s32.totalorder %s31, 1
      %p117 = por %p115, %p116
      %p119 = scmp.ne.s32.totalorder %s104, %s118
      %p120 = scmp.eq.s32.totalorder %s31, 0
      %p121 = por %p119, %p120
      %s123 = sadd.s32 %s122, 1
      %p126 = scmp.eq.s32.totalorder %s25, 1
      %p127 = scmp.ne.s32.totalorder %s122, %s124
      %p128 = scmp.eq.s32.totalorder %s25, 0
      %p129 = por %p127, %p128
      %p130 = scmp.ne.s32.totalorder %s122, %s124
      %p131 = scmp.eq.s32.totalorder %s30, 1
      %p132 = por %p130, %p131
      %p133 = scmp.ne.s32.totalorder %s124, %s125
      %p134 = scmp.eq.s32.totalorder %s30, 0
      %p135 = por %p133, %p134
      %p136 = scmp.ne.s32.totalorder %s124, %s125
      %p137 = scmp.eq.s32.totalorder %s31, 1
      %p138 = por %p136, %p137
      %p140 = scmp.ne.s32.totalorder %s125, %s139
      %p141 = scmp.eq.s32.totalorder %s31, 0
      %p142 = por %p140, %p141
      %s144 = sadd.s32 %s143, 1
      %p147 = scmp.eq.s32.totalorder %s25, 1
      %p148 = scmp.ne.s32.totalorder %s143, %s145
      %p149 = scmp.eq.s32.totalorder %s25, 0
      %p150 = por %p148, %p149
      %p151 = scmp.ne.s32.totalorder %s143, %s145
      %p152 = scmp.eq.s32.totalorder %s30, 1
      %p153 = por %p151, %p152
      %p154 = scmp.ne.s32.totalorder %s145, %s146
      %p155 = scmp.eq.s32.totalorder %s30, 0
      %p156 = por %p154, %p155
      %p157 = scmp.ne.s32.totalorder %s145, %s146
      %p158 = scmp.eq.s32.totalorder %s31, 1
      %p159 = por %p157, %p158
      %p161 = scmp.ne.s32.totalorder %s146, %s160
      %p162 = scmp.eq.s32.totalorder %s31, 0
      %p163 = por %p161, %p162
      %s165 = sadd.s32 %s164, 1
      %p168 = scmp.eq.s32.totalorder %s25, 1
      %p169 = scmp.ne.s32.totalorder %s164, %s166
      %p170 = scmp.eq.s32.totalorder %s25, 0
      %p171 = por %p169, %p170
      %p172 = scmp.ne.s32.totalorder %s164, %s166
      %p173 = scmp.eq.s32.totalorder %s30, 1
      %p174 = por %p172, %p173
      %p175 = scmp.ne.s32.totalorder %s166, %s167
      %p176 = scmp.eq.s32.totalorder %s30, 0
      %p177 = por %p175, %p176
      %p178 = scmp.ne.s32.totalorder %s166, %s167
      %p179 = scmp.eq.s32.totalorder %s31, 1
      %p180 = por %p178, %p179
      %p182 = scmp.ne.s32.totalorder %s167, %s181
      %p183 = scmp.eq.s32.totalorder %s31, 0
      %p184 = por %p182, %p183
      %s186 = sadd.s32 %s185, 1
      %p189 = scmp.eq.s32.totalorder %s25, 1
      %p190 = scmp.ne.s32.totalorder %s185, %s187
      %p191 = scmp.eq.s32.totalorder %s25, 0
      %p192 = por %p190, %p191
      %p193 = scmp.ne.s32.totalorder %s185, %s187
      %p194 = scmp.eq.s32.totalorder %s30, 1
      %p195 = por %p193, %p194
      %p196 = scmp.ne.s32.totalorder %s187, %s188
      %p197 = scmp.eq.s32.totalorder %s30, 0
      %p198 = por %p196, %p197
      %p199 = scmp.ne.s32.totalorder %s187, %s188
      %p200 = scmp.eq.s32.totalorder %s31, 1
      %p201 = por %p199, %p200
      %p203 = scmp.ne.s32.totalorder %s188, %s202
      %p204 = scmp.eq.s32.totalorder %s31, 0
      %p205 = por %p203, %p204
      %s207 = sadd.s32 %s206, 1
      %p210 = scmp.eq.s32.totalorder %s25, 1
      %p211 = scmp.ne.s32.totalorder %s206, %s208
      %p212 = scmp.eq.s32.totalorder %s25, 0
      %p213 = por %p211, %p212
      %p214 = scmp.ne.s32.totalorder %s206, %s208
      %p215 = scmp.eq.s32.totalorder %s30, 1
      %p216 = por %p214, %p215
      %p217 = scmp.ne.s32.totalorder %s208, %s209
      %p218 = scmp.eq.s32.totalorder %s30, 0
      %p219 = por %p217, %p218
      %p220 = scmp.ne.s32.totalorder %s208, %s209
      %p221 = scmp.eq.s32.totalorder %s31, 1
      %p222 = por %p220, %p221
      %p224 = scmp.ne.s32.totalorder %s209, %s223
      %p225 = scmp.eq.s32.totalorder %s31, 0
      %p226 = por %p224, %p225
      %s228 = sadd.s32 %s227, 1
      %p231 = scmp.eq.s32.totalorder %s25, 1
      %p232 = scmp.ne.s32.totalorder %s227, %s229
      %p233 = scmp.eq.s32.totalorder %s25, 0
      %p234 = por %p232, %p233
      %p235 = scmp.ne.s32.totalorder %s227, %s229
      %p236 = scmp.eq.s32.totalorder %s30, 1
      %p237 = por %p235, %p236
      %p238 = scmp.ne.s32.totalorder %s229, %s230
      %p239 = scmp.eq.s32.totalorder %s30, 0
      %p240 = por %p238, %p239
      %p241 = scmp.ne.s32.totalorder %s229, %s230
      %p242 = scmp.eq.s32.totalorder %s31, 1
      %p243 = por %p241, %p242
      %p245 = scmp.ne.s32.totalorder %s230, %s244
      %p246 = scmp.eq.s32.totalorder %s31, 0
      %p247 = por %p245, %p246
      %s249 = sadd.s32 %s248, 1
      %p252 = scmp.eq.s32.totalorder %s25, 1
      %p253 = scmp.ne.s32.totalorder %s248, %s250
      %p254 = scmp.eq.s32.totalorder %s25, 0
      %p255 = por %p253, %p254
      %p256 = scmp.ne.s32.totalorder %s248, %s250
      %p257 = scmp.eq.s32.totalorder %s30, 1
      %p258 = por %p256, %p257
      %p259 = scmp.ne.s32.totalorder %s250, %s251
      %p260 = scmp.eq.s32.totalorder %s30, 0
      %p261 = por %p259, %p260
      %p262 = scmp.ne.s32.totalorder %s250, %s251
      %p263 = scmp.eq.s32.totalorder %s31, 1
      %p264 = por %p262, %p263
      %p266 = scmp.ne.s32.totalorder %s251, %s265
      %p267 = scmp.eq.s32.totalorder %s31, 0
      %p268 = por %p266, %p267
      %s270 = sadd.s32 %s269, 1
      %p273 = scmp.eq.s32.totalorder %s25, 1
      %p274 = scmp.ne.s32.totalorder %s269, %s271
      %p275 = scmp.eq.s32.totalorder %s25, 0
      %p276 = por %p274, %p275
      %p277 = scmp.ne.s32.totalorder %s269, %s271
      %p278 = scmp.eq.s32.totalorder %s30, 1
      %p279 = por %p277, %p278
      %p280 = scmp.ne.s32.totalorder %s271, %s272
      %p281 = scmp.eq.s32.totalorder %s30, 0
      %p282 = por %p280, %p281
      %p283 = scmp.ne.s32.totalorder %s271, %s272
      %p284 = scmp.eq.s32.totalorder %s31, 1
      %p285 = por %p283, %p284
      %p287 = scmp.ne.s32.totalorder %s272, %s286
      %p288 = scmp.eq.s32.totalorder %s31, 0
      %p289 = por %p287, %p288
      %s291 = sadd.s32 %s290, 1
      %p294 = scmp.eq.s32.totalorder %s25, 1
      %p295 = scmp.ne.s32.totalorder %s290, %s292
      %p296 = scmp.eq.s32.totalorder %s25, 0
      %p297 = por %p295, %p296
      %p298 = scmp.ne.s32.totalorder %s290, %s292
      %p299 = scmp.eq.s32.totalorder %s30, 1
      %p300 = por %p298, %p299
      %p301 = scmp.ne.s32.totalorder %s292, %s293
      %p302 = scmp.eq.s32.totalorder %s30, 0
      %p303 = por %p301, %p302
      %p304 = scmp.ne.s32.totalorder %s292, %s293
      %p305 = scmp.eq.s32.totalorder %s31, 1
      %p306 = por %p304, %p305
      %p308 = scmp.ne.s32.totalorder %s293, %s307
      %p309 = scmp.eq.s32.totalorder %s31, 0
      %p310 = por %p308, %p309
      %s311 = ssub.s32 %s25, %s32
      %p312 = scmp.eq.s32.totalorder %s311, 0
      %s314 = sadd.s32 %s313, 1
      %s315 = scalar_select %p312, %s313, %s314
      %p318 = pneg %p312
      %p319 = scmp.eq.s32.totalorder %s25, 1
      %p320 = por %p318, %p319
      %p321 = scmp.ne.s32.totalorder %s313, %s316
      %p322 = scmp.eq.s32.totalorder %s25, 0
      %p323 = por %p321, %p322
      %p324 = scmp.ne.s32.totalorder %s313, %s316
      %p325 = scmp.eq.s32.totalorder %s30, 1
      %p326 = por %p324, %p325
      %p327 = scmp.ne.s32.totalorder %s316, %s317
      %p328 = scmp.eq.s32.totalorder %s30, 0
      %p329 = por %p327, %p328
      %p330 = scmp.ne.s32.totalorder %s316, %s317
      %p331 = scmp.eq.s32.totalorder %s31, 1
      %p332 = por %p330, %p331
      %p334 = scmp.ne.s32.totalorder %s317, %s333
      %p335 = scmp.eq.s32.totalorder %s31, 0
      %p336 = por %p334, %p335
      %p337 = scmp.le.s32.totalorder 1, %s25
      %p338 = scmp.lt.s32.totalorder %s25, 3
      %p339 = pnand %p337, %p338
      %p340 = pneg %p339
      // Predicated region
      $region9: #{tpu_custom_call.1} parent=5 // pred_check
        _
      $region10: #{tpu_custom_call.1} parent=5 // pred_check_branch
        %342 = sbr.rel (%p339) target = $region12
      $region11: #{tpu_custom_call.1} parent=5 // pred_region
        %s343 = ssub.s32 %s25, 1
        // Predicated region
        $region13: #{tpu_custom_call.1} parent=11 // pred_check
          %p344 = pneg %p72
        $region14: #{tpu_custom_call.1} parent=11 // pred_check_branch
          %346 = sbr.rel (%p344) target = $region16
        $region15: #{tpu_custom_call.1} parent=11 // pred_region
          _
        $region16: #{tpu_custom_call.1} parent=11 // pred_fallthru
          _
        // Predicated region
        $region17: #{tpu_custom_call.1} parent=11 // pred_check
          %p347 = pneg %p93
        $region18: #{tpu_custom_call.1} parent=11 // pred_check_branch
          %349 = sbr.rel (%p347) target = $region20
        $region19: #{tpu_custom_call.1} parent=11 // pred_region
          _
        $region20: #{tpu_custom_call.1} parent=11 // pred_fallthru
          _
        // Predicated region
        $region21: #{tpu_custom_call.1} parent=11 // pred_check
          %p350 = pneg %p114
        $region22: #{tpu_custom_call.1} parent=11 // pred_check_branch
          %352 = sbr.rel (%p350) target = $region24
        $region23: #{tpu_custom_call.1} parent=11 // pred_region
          _
        $region24: #{tpu_custom_call.1} parent=11 // pred_fallthru
          _
        // Predicated region
        $region25: #{tpu_custom_call.1} parent=11 // pred_check
          %p353 = pneg %p135
        $region26: #{tpu_custom_call.1} parent=11 // pred_check_branch
          %355 = sbr.rel (%p353) target = $region28
        $region27: #{tpu_custom_call.1} parent=11 // pred_region
          _
        $region28: #{tpu_custom_call.1} parent=11 // pred_fallthru
          _
        // Predicated region
        $region29: #{tpu_custom_call.1} parent=11 // pred_check
          %p356 = pneg %p156
        $region30: #{tpu_custom_call.1} parent=11 // pred_check_branch
          %358 = sbr.rel (%p356) target = $region32
        $region31: #{tpu_custom_call.1} parent=11 // pred_region
          %s360 = ssub.s32 1024, 1024
          %361 = vsyncadd [#allocation3], %s360
          %s362 = sshll.u32 [#allocation2], 4
          %s363 = int_to_ptr.vmem [resolvable:$true] %s362
          %368 = dma.hbm_to_vmem [thread:$0]  %s5, 1024, %s363, [#allocation3], 64, 64, 4
        $region32: #{tpu_custom_call.1} parent=11 // pred_fallthru
          _
        // Predicated region
        $region33: #{tpu_custom_call.1} parent=11 // pred_check
          %p369 = pneg %p177
        $region34: #{tpu_custom_call.1} parent=11 // pred_check_branch
          %371 = sbr.rel (%p369) target = $region36
        $region35: #{tpu_custom_call.1} parent=11 // pred_region
          %s373 = ssub.s32 1024, 1024
          %374 = vsyncadd [#allocation6], %s373
          %s375 = sshll.u32 [#allocation5], 4
          %s376 = int_to_ptr.vmem [resolvable:$true] %s375
          %381 = dma.hbm_to_vmem [thread:$0]  %s6, 1024, %s376, [#allocation6], 64, 64, 4
        $region36: #{tpu_custom_call.1} parent=11 // pred_fallthru
          _
        // Predicated region
        $region37: #{tpu_custom_call.1} parent=11 // pred_check
          %p382 = pneg %p198
        $region38: #{tpu_custom_call.1} parent=11 // pred_check_branch
          %384 = sbr.rel (%p382) target = $region40
        $region39: #{tpu_custom_call.1} parent=11 // pred_region
          %s386 = ssub.s32 1024, 1024
          %387 = vsyncadd [#allocation6], %s386
          %s388 = sshll.u32 [#allocation7], 4
          %s389 = int_to_ptr.vmem [resolvable:$true] %s388
          %394 = dma.hbm_to_vmem [thread:$0]  %s7, 1024, %s389, [#allocation6], 64, 64, 4
        $region40: #{tpu_custom_call.1} parent=11 // pred_fallthru
          _
        // Predicated region
        $region41: #{tpu_custom_call.1} parent=11 // pred_check
          %p395 = pneg %p219
        $region42: #{tpu_custom_call.1} parent=11 // pred_check_branch
          %397 = sbr.rel (%p395) target = $region44
        $region43: #{tpu_custom_call.1} parent=11 // pred_region
          _
        $region44: #{tpu_custom_call.1} parent=11 // pred_fallthru
          _
        // Predicated region
        $region45: #{tpu_custom_call.1} parent=11 // pred_check
          %p398 = pneg %p240
        $region46: #{tpu_custom_call.1} parent=11 // pred_check_branch
          %400 = sbr.rel (%p398) target = $region48
        $region47: #{tpu_custom_call.1} parent=11 // pred_region
          _
        $region48: #{tpu_custom_call.1} parent=11 // pred_fallthru
          _
        // Predicated region
        $region49: #{tpu_custom_call.1} parent=11 // pred_check
          %p401 = pneg %p261
        $region50: #{tpu_custom_call.1} parent=11 // pred_check_branch
          %403 = sbr.rel (%p401) target = $region52
        $region51: #{tpu_custom_call.1} parent=11 // pred_region
          _
        $region52: #{tpu_custom_call.1} parent=11 // pred_fallthru
          _
        // Predicated region
        $region53: #{tpu_custom_call.1} parent=11 // pred_check
          %p404 = pneg %p282
        $region54: #{tpu_custom_call.1} parent=11 // pred_check_branch
          %406 = sbr.rel (%p404) target = $region56
        $region55: #{tpu_custom_call.1} parent=11 // pred_region
          %s408 = ssub.s32 1024, 1024
          %409 = vsyncadd [#allocation9], %s408
          %s410 = sshll.u32 [#allocation8], 4
          %s411 = int_to_ptr.vmem [resolvable:$true] %s410
          %416 = dma.hbm_to_vmem [thread:$0]  %s11, 1024, %s411, [#allocation9], 64, 64, 4
        $region56: #{tpu_custom_call.1} parent=11 // pred_fallthru
          _
        // Predicated region
        $region57: #{tpu_custom_call.1} parent=11 // pred_check
          %p417 = pneg %p303
        $region58: #{tpu_custom_call.1} parent=11 // pred_check_branch
          %419 = sbr.rel (%p417) target = $region60
        $region59: #{tpu_custom_call.1} parent=11 // pred_region
          _
        $region60: #{tpu_custom_call.1} parent=11 // pred_fallthru
          _
      $region12: #{tpu_custom_call.1} parent=5 // pred_fallthru
        _
      %p420 = scmp.lt.s32.totalorder %s25, 2
      // Predicated region
      $region61: #{tpu_custom_call.1} parent=5 // pred_check
        %p421 = pneg %p420
      $region62: #{tpu_custom_call.1} parent=5 // pred_check_branch
        %423 = sbr.rel (%p421) target = $region64
      $region63: #{tpu_custom_call.1} parent=5 // pred_region
        // Predicated region
        $region65: #{tpu_custom_call.1} parent=63 // pred_check
          %p424 = pneg %p45
        $region66: #{tpu_custom_call.1} parent=63 // pred_check_branch
          %426 = sbr.rel (%p424) target = $region68
        $region67: #{tpu_custom_call.1} parent=63 // pred_region
          %p427 = scmp.lt.s32.totalorder %s25, 1
          %s428 = scalar_select %p427, %s25, 1
          %s429 = smul.addr %s428, 8
          %s430 = smul.addr %s429, 8
          %s431 = scalar_lea.vmem %s0, %s430
        $region68: #{tpu_custom_call.1} parent=63 // pred_fallthru
          _
      $region64: #{tpu_custom_call.1} parent=5 // pred_fallthru
        _
      %p432 = scmp.le.s32.totalorder 1, %s25
      %p433 = scmp.lt.s32.totalorder %s25, 3
      %p434 = pnand %p432, %p433
      %p435 = pneg %p434
      // Predicated region
      $region69: #{tpu_custom_call.1} parent=5 // pred_check
        _
      $region70: #{tpu_custom_call.1} parent=5 // pred_check_branch
        %437 = sbr.rel (%p434) target = $region72
      $region71: #{tpu_custom_call.1} parent=5 // pred_region
        %s438 = ssub.s32 %s25, 1
        // Predicated region
        $region73: #{tpu_custom_call.1} parent=71 // pred_check
          %p439 = pneg %p156
        $region74: #{tpu_custom_call.1} parent=71 // pred_check_branch
          %441 = sbr.rel (%p439) target = $region76
        $region75: #{tpu_custom_call.1} parent=71 // pred_region
          %442 = dma.done [#allocation3], 1024
        $region76: #{tpu_custom_call.1} parent=71 // pred_fallthru
          _
        // Predicated region
        $region77: #{tpu_custom_call.1} parent=71 // pred_check
          %p443 = pneg %p177
        $region78: #{tpu_custom_call.1} parent=71 // pred_check_branch
          %445 = sbr.rel (%p443) target = $region80
        $region79: #{tpu_custom_call.1} parent=71 // pred_region
          %446 = dma.done [#allocation6], 1024
        $region80: #{tpu_custom_call.1} parent=71 // pred_fallthru
          _
        // Predicated region
        $region81: #{tpu_custom_call.1} parent=71 // pred_check
          %p447 = pneg %p198
        $region82: #{tpu_custom_call.1} parent=71 // pred_check_branch
          %449 = sbr.rel (%p447) target = $region84
        $region83: #{tpu_custom_call.1} parent=71 // pred_region
          %450 = dma.done [#allocation6], 1024
        $region84: #{tpu_custom_call.1} parent=71 // pred_fallthru
          _
        // Predicated region
        $region85: #{tpu_custom_call.1} parent=71 // pred_check
          %p451 = pneg %p282
        $region86: #{tpu_custom_call.1} parent=71 // pred_check_branch
          %453 = sbr.rel (%p451) target = $region88
        $region87: #{tpu_custom_call.1} parent=71 // pred_region
          %454 = dma.done [#allocation9], 1024
        $region88: #{tpu_custom_call.1} parent=71 // pred_fallthru
          _
        %p455 = scmp.lt.s32.totalorder %s30, 1
        %s456 = scalar_select %p455, %s30, 1
        %s457 = smul.addr %s456, 8
        %s458 = smul.addr %s457, 8
        %s459 = scalar_lea.vmem %s0, %s458
        %p460 = pneg %p51
        %p461 = pneg %p48
        %p462 = pneg %p72
        %p463 = pneg %p69
        %p464 = pneg %p93
        %p465 = pneg %p90
        %p466 = pneg %p114
        %p467 = pneg %p111
        %p468 = pneg %p135
        %p469 = pneg %p132
        %p470 = pneg %p156
        %p471 = pneg %p153
        %p472 = pneg %p177
        %p473 = pneg %p174
        %p474 = pneg %p198
        %p475 = pneg %p195
        %p476 = pneg %p219
        %p477 = pneg %p216
        %p478 = pneg %p240
        %p479 = pneg %p237
        %p480 = pneg %p261
        %p481 = pneg %p258
        %p482 = pneg %p282
        %p483 = pneg %p279
        %p484 = pneg %p303
        %p485 = pneg %p300
        %p486 = pneg %p329
        %p487 = pneg %p326
        %s488 = sand.u32 %s316, 1
        %s489 = scalar_lea.sflag [#allocation4], %s488
        %s490 = sand.u32 %s316, 1
        %s491 = smul.addr %s490, 64
        %s492 = scalar_lea.vmem [#allocation10], %s491
        %p493 = scmp.lt.s32.totalorder %s30, 1
        %s494 = scalar_select %p493, %s30, 1
        %s495 = smul.addr %s494, 8
        %s496 = smul.addr %s495, 8
        %s497 = scalar_lea.vmem %s0, %s496
        %v499 = vld [vmem:[%s497] sm:$0xff]
        %v500 = vld [vmem:[%s497 + $0x8] sm:$0xff]
        %v501 = vld [vmem:[%s497 + $0x10] sm:$0xff]
        %v502 = vld [vmem:[%s497 + $0x18] sm:$0xff]
        %v503 = vld [vmem:[%s497 + $0x20] sm:$0xff]
        %v504 = vld [vmem:[%s497 + $0x28] sm:$0xff]
        %v505 = vld [vmem:[%s497 + $0x30] sm:$0xff]
        %v506 = vld [vmem:[%s497 + $0x38] sm:$0xff]
        %v507 = vld [vmem:[%s1] sm:$0xff]
        %v508 = vld [vmem:[%s1 + $0x8] sm:$0xff]
        %v509 = vld [vmem:[%s1 + $0x10] sm:$0xff]
        %v510 = vld [vmem:[%s1 + $0x18] sm:$0xff]
        %v511 = vld [vmem:[%s1 + $0x20] sm:$0xff]
        %v512 = vld [vmem:[%s1 + $0x28] sm:$0xff]
        %v513 = vld [vmem:[%s1 + $0x30] sm:$0xff]
        %v514 = vld [vmem:[%s1 + $0x38] sm:$0xff]
        %v515 = vld [vmem:[%s1 + $0x40] sm:$0xff]
        %v516 = vld [vmem:[%s1 + $0x48] sm:$0xff]
        %v517 = vld [vmem:[%s1 + $0x50] sm:$0xff]
        %v518 = vld [vmem:[%s1 + $0x58] sm:$0xff]
        %v519 = vld [vmem:[%s1 + $0x60] sm:$0xff]
        %v520 = vld [vmem:[%s1 + $0x68] sm:$0xff]
        %v521 = vld [vmem:[%s1 + $0x70] sm:$0xff]
        %v522 = vld [vmem:[%s1 + $0x78] sm:$0xff]
        %v523 = vld [vmem:[%s2] sm:$0xff]
        %v524 = vld [vmem:[%s2 + $0x8] sm:$0xff]
        %v525 = vadd.f32 %v499, %v500
        %v526 = vadd.f32 %v525, %v501
        %v527 = vadd.f32 %v526, %v502
        %v528 = vadd.f32 %v527, %v503
        %v529 = vadd.f32 %v528, %v504
        %v530 = vadd.f32 %v529, %v505
        %v531 = vadd.f32 %v530, %v506
        %v532 = vrot.slane %v531, 4
        %v533 = vadd.f32 %v531, %v532
        %v534 = vrot.slane %v533, 2
        %v535 = vadd.f32 %v533, %v534
        %v536 = vrot.slane %v535, 1
        %v537 = vadd.f32 %v535, %v536
        %v538 = vrcp.pop 64.0
        %v539 = vmul.f32 %v537, %v538
        %540 = vmatprep.subr.mxu0 0.0
        %541 = vmatpush1.msra.mxu0 %v507
        %542 = vmatprep.subr.mxu0 0.0
        %543 = vmatpush1.msra.mxu0 %v508
        %544 = vmatprep.subr.mxu0 0.0
        %545 = vmatpush1.msra.mxu0 %v509
        %546 = vmatprep.subr.mxu0 0.0
        %547 = vmatpush1.msra.mxu0 %v510
        %548 = vmatprep.subr.mxu0 0.0
        %549 = vmatpush1.msra.mxu0 %v511
        %550 = vmatprep.subr.mxu0 0.0
        %551 = vmatpush1.msra.mxu0 %v512
        %552 = vmatprep.subr.mxu0 0.0
        %553 = vmatpush1.msra.mxu0 %v513
        %554 = vmatprep.subr.mxu0 0.0
        %555 = vmatpush1.msra.mxu0 %v514
        %556 = vmatprep.subr.mxu0 0.0
        %557 = vmatpush1.msra.mxu0 %v515
        %558 = vmatprep.subr.mxu0 0.0
        %559 = vmatpush1.msra.mxu0 %v516
        %560 = vmatprep.subr.mxu0 0.0
        %561 = vmatpush1.msra.mxu0 %v517
        %562 = vmatprep.subr.mxu0 0.0
        %563 = vmatpush1.msra.mxu0 %v518
        %564 = vmatprep.subr.mxu0 0.0
        %565 = vmatpush1.msra.mxu0 %v519
        %566 = vmatprep.subr.mxu0 0.0
        %567 = vmatpush1.msra.mxu0 %v520
        %568 = vmatprep.subr.mxu0 0.0
        %569 = vmatpush1.msra.mxu0 %v521
        %570 = vmatprep.subr.mxu0 0.0
        %571 = vmatpush1.msra.mxu0 %v522
        %572 = vmatprep.subr.mxu0 0.0
        %573 = vmatpush1.msra.mxu0 0.0
        %574 = vmatprep.subr.mxu0 0.0
        %575 = vmatpush1.msra.mxu0 0.0
        %576 = vmatprep.subr.mxu0 0.0
        %577 = vmatpush1.msra.mxu0 0.0
        %578 = vmatprep.subr.mxu0 0.0
        %579 = vmatpush1.msra.mxu0 0.0
        %580 = vmatprep.subr.mxu0 0.0
        %581 = vmatpush1.msra.mxu0 0.0
        %582 = vmatprep.subr.mxu0 0.0
        %583 = vmatpush1.msra.mxu0 0.0
        %584 = vmatprep.subr.mxu0 0.0
        %585 = vmatpush1.msra.mxu0 0.0
        %586 = vmatprep.subr.mxu0 0.0
        %587 = vmatpush1.msra.mxu0 0.0
        %588 = vmatprep.subr.mxu0 0.0
        %589 = vmatpush1.msra.mxu0 0.0
        %590 = vmatprep.subr.mxu0 0.0
        %591 = vmatpush1.msra.mxu0 0.0
        %592 = vmatprep.subr.mxu0 0.0
        %593 = vmatpush1.msra.mxu0 0.0
        %594 = vmatprep.subr.mxu0 0.0
        %595 = vmatpush1.msra.mxu0 0.0
        %596 = vmatprep.subr.mxu0 0.0
        %597 = vmatpush1.msra.mxu0 0.0
        %598 = vmatprep.subr.mxu0 0.0
        %599 = vmatpush1.msra.mxu0 0.0
        %600 = vmatprep.subr.mxu0 0.0
        %601 = vmatpush1.msra.mxu0 0.0
        %602 = vmatprep.subr.mxu0 0.0
        %603 = vmatpush1.msra.mxu0 0.0
        %604 = vmatprep.mubr.f32.mxu0 0.0
        %605 = vmatmul.mubr.f32.gmra.mrb[0].mxu0 %v539
        %v606 = vpop.f32.mrb[0].mxu0
        %v607 = vadd.f32 0.0, %v606
        %v608 = vpop.f32.mrb[0].mxu0
        %609 = vdwg.mxu0
        %v610 = vmul.f32 %v607, 0.5
        %vm611 = vcmask 130048
        %v613 = vsel %vm611, %v610, 0
        %615 = vmatprep.subr.mxu0 0.0
        %616 = vmatpush1.msra.mxu0 %v523
        %617 = vmatprep.subr.mxu0 0.0
        %618 = vmatpush1.msra.mxu0 %v524
        %619 = vmatprep.subr.mxu0 0.0
        %620 = vmatpush1.msra.mxu0 0.0
        %621 = vmatprep.subr.mxu0 0.0
        %622 = vmatpush1.msra.mxu0 0.0
        %623 = vmatprep.subr.mxu0 0.0
        %624 = vmatpush1.msra.mxu0 0.0
        %625 = vmatprep.subr.mxu0 0.0
        %626 = vmatpush1.msra.mxu0 0.0
        %627 = vmatprep.subr.mxu0 0.0
        %628 = vmatpush1.msra.mxu0 0.0
        %629 = vmatprep.subr.mxu0 0.0
        %630 = vmatpush1.msra.mxu0 0.0
        %631 = vmatprep.subr.mxu0 0.0
        %632 = vmatpush1.msra.mxu0 0.0
        %633 = vmatprep.subr.mxu0 0.0
        %634 = vmatpush1.msra.mxu0 0.0
        %635 = vmatprep.subr.mxu0 0.0
        %636 = vmatpush1.msra.mxu0 0.0
        %637 = vmatprep.subr.mxu0 0.0
        %638 = vmatpush1.msra.mxu0 0.0
        %639 = vmatprep.subr.mxu0 0.0
        %640 = vmatpush1.msra.mxu0 0.0
        %641 = vmatprep.subr.mxu0 0.0
        %642 = vmatpush1.msra.mxu0 0.0
        %643 = vmatprep.subr.mxu0 0.0
        %644 = vmatpush1.msra.mxu0 0.0
        %645 = vmatprep.subr.mxu0 0.0
        %646 = vmatpush1.msra.mxu0 0.0
        %647 = vmatprep.subr.mxu0 0.0
        %648 = vmatpush1.msra.mxu0 0.0
        %649 = vmatprep.subr.mxu0 0.0
        %650 = vmatpush1.msra.mxu0 0.0
        %651 = vmatprep.subr.mxu0 0.0
        %652 = vmatpush1.msra.mxu0 0.0
        %653 = vmatprep.subr.mxu0 0.0
        %654 = vmatpush1.msra.mxu0 0.0
        %655 = vmatprep.subr.mxu0 0.0
        %656 = vmatpush1.msra.mxu0 0.0
        %657 = vmatprep.subr.mxu0 0.0
        %658 = vmatpush1.msra.mxu0 0.0
        %659 = vmatprep.subr.mxu0 0.0
        %660 = vmatpush1.msra.mxu0 0.0
        %661 = vmatprep.subr.mxu0 0.0
        %662 = vmatpush1.msra.mxu0 0.0
        %663 = vmatprep.subr.mxu0 0.0
        %664 = vmatpush1.msra.mxu0 0.0
        %665 = vmatprep.subr.mxu0 0.0
        %666 = vmatpush1.msra.mxu0 0.0
        %667 = vmatprep.subr.mxu0 0.0
        %668 = vmatpush1.msra.mxu0 0.0
        %669 = vmatprep.subr.mxu0 0.0
        %670 = vmatpush1.msra.mxu0 0.0
        %671 = vmatprep.subr.mxu0 0.0
        %672 = vmatpush1.msra.mxu0 0.0
        %673 = vmatprep.subr.mxu0 0.0
        %674 = vmatpush1.msra.mxu0 0.0
        %675 = vmatprep.subr.mxu0 0.0
        %676 = vmatpush1.msra.mxu0 0.0
        %677 = vmatprep.subr.mxu0 0.0
        %678 = vmatpush1.msra.mxu0 0.0
        %679 = vmatprep.mubr.f32.mxu0 0.0
        %680 = vmatmul.mubr.f32.gmra.mrb[0].mxu0 %v613
        %v681 = vpop.f32.mrb[0].mxu0
        %v682 = vadd.f32 0.0, %v681
        %v683 = vpop.f32.mrb[0].mxu0
        %684 = vdwg.mxu0
        %v685 = vlaneseq
        %v686 = vshrl.u32 %v685, 7
        %v687 = vsub.s32 0, %v686
        %v688 = vrot.slane %v682, %v687
        %v689 = vsub.f32 %v499, %v688
        %v690 = vsub.f32 %v500, %v688
        %v691 = vsub.f32 %v501, %v688
        %v692 = vsub.f32 %v502, %v688
        %v693 = vsub.f32 %v503, %v688
        %v694 = vsub.f32 %v504, %v688
        %v695 = vsub.f32 %v505, %v688
        %v696 = vsub.f32 %v506, %v688
        %v697 = vmul.f32 %v689, %v689
        %v698 = vmul.f32 %v690, %v690
        %v699 = vmul.f32 %v691, %v691
        %v700 = vmul.f32 %v692, %v692
        %v701 = vmul.f32 %v693, %v693
        %v702 = vmul.f32 %v694, %v694
        %v703 = vmul.f32 %v695, %v695
        %v704 = vmul.f32 %v696, %v696
        %v705 = vadd.f32 %v697, %v698
        %v706 = vadd.f32 %v705, %v699
        %v707 = vadd.f32 %v706, %v700
        %v708 = vadd.f32 %v707, %v701
        %v709 = vadd.f32 %v708, %v702
        %v710 = vadd.f32 %v709, %v703
        %v711 = vadd.f32 %v710, %v704
        %v712 = vrot.slane %v711, 4
        %v713 = vadd.f32 %v711, %v712
        %v714 = vrot.slane %v713, 2
        %v715 = vadd.f32 %v713, %v714
        %v716 = vrot.slane %v715, 1
        %v717 = vadd.f32 %v715, %v716
        %v718 = vmul.f32 %v717, %v538
        %719 = vmatprep.subr.mxu0 0.0
        %720 = vmatpush1.msra.mxu0 %v507
        %721 = vmatprep.subr.mxu0 0.0
        %722 = vmatpush1.msra.mxu0 %v508
        %723 = vmatprep.subr.mxu0 0.0
        %724 = vmatpush1.msra.mxu0 %v509
        %725 = vmatprep.subr.mxu0 0.0
        %726 = vmatpush1.msra.mxu0 %v510
        %727 = vmatprep.subr.mxu0 0.0
        %728 = vmatpush1.msra.mxu0 %v511
        %729 = vmatprep.subr.mxu0 0.0
        %730 = vmatpush1.msra.mxu0 %v512
        %731 = vmatprep.subr.mxu0 0.0
        %732 = vmatpush1.msra.mxu0 %v513
        %733 = vmatprep.subr.mxu0 0.0
        %734 = vmatpush1.msra.mxu0 %v514
        %735 = vmatprep.subr.mxu0 0.0
        %736 = vmatpush1.msra.mxu0 %v515
        %737 = vmatprep.subr.mxu0 0.0
        %738 = vmatpush1.msra.mxu0 %v516
        %739 = vmatprep.subr.mxu0 0.0
        %740 = vmatpush1.msra.mxu0 %v517
        %741 = vmatprep.subr.mxu0 0.0
        %742 = vmatpush1.msra.mxu0 %v518
        %743 = vmatprep.subr.mxu0 0.0
        %744 = vmatpush1.msra.mxu0 %v519
        %745 = vmatprep.subr.mxu0 0.0
        %746 = vmatpush1.msra.mxu0 %v520
        %747 = vmatprep.subr.mxu0 0.0
        %748 = vmatpush1.msra.mxu0 %v521
        %749 = vmatprep.subr.mxu0 0.0
        %750 = vmatpush1.msra.mxu0 %v522
        %751 = vmatprep.subr.mxu0 0.0
        %752 = vmatpush1.msra.mxu0 0.0
        %753 = vmatprep.subr.mxu0 0.0
        %754 = vmatpush1.msra.mxu0 0.0
        %755 = vmatprep.subr.mxu0 0.0
        %756 = vmatpush1.msra.mxu0 0.0
        %757 = vmatprep.subr.mxu0 0.0
        %758 = vmatpush1.msra.mxu0 0.0
        %759 = vmatprep.subr.mxu0 0.0
        %760 = vmatpush1.msra.mxu0 0.0
        %761 = vmatprep.subr.mxu0 0.0
        %762 = vmatpush1.msra.mxu0 0.0
        %763 = vmatprep.subr.mxu0 0.0
        %764 = vmatpush1.msra.mxu0 0.0
        %765 = vmatprep.subr.mxu0 0.0
        %766 = vmatpush1.msra.mxu0 0.0
        %767 = vmatprep.subr.mxu0 0.0
        %768 = vmatpush1.msra.mxu0 0.0
        %769 = vmatprep.subr.mxu0 0.0
        %770 = vmatpush1.msra.mxu0 0.0
        %771 = vmatprep.subr.mxu0 0.0
        %772 = vmatpush1.msra.mxu0 0.0
        %773 = vmatprep.subr.mxu0 0.0
        %774 = vmatpush1.msra.mxu0 0.0
        %775 = vmatprep.subr.mxu0 0.0
        %776 = vmatpush1.msra.mxu0 0.0
        %777 = vmatprep.subr.mxu0 0.0
        %778 = vmatpush1.msra.mxu0 0.0
        %779 = vmatprep.subr.mxu0 0.0
        %780 = vmatpush1.msra.mxu0 0.0
        %781 = vmatprep.subr.mxu0 0.0
        %782 = vmatpush1.msra.mxu0 0.0
        %783 = vmatprep.mubr.f32.mxu0 0.0
        %784 = vmatmul.mubr.f32.gmra.mrb[0].mxu0 %v718
        %v785 = vpop.f32.mrb[0].mxu0
        %v786 = vadd.f32 0.0, %v785
        %v787 = vpop.f32.mrb[0].mxu0
        %788 = vdwg.mxu0
        %v789 = vmul.f32 %v786, 0.5
        %v791 = vsel %vm611, %v789, 0
        %793 = vmatprep.subr.mxu0 0.0
        %794 = vmatpush1.msra.mxu0 %v523
        %795 = vmatprep.subr.mxu0 0.0
        %796 = vmatpush1.msra.mxu0 %v524
        %797 = vmatprep.subr.mxu0 0.0
        %798 = vmatpush1.msra.mxu0 0.0
        %799 = vmatprep.subr.mxu0 0.0
        %800 = vmatpush1.msra.mxu0 0.0
        %801 = vmatprep.subr.mxu0 0.0
        %802 = vmatpush1.msra.mxu0 0.0
        %803 = vmatprep.subr.mxu0 0.0
        %804 = vmatpush1.msra.mxu0 0.0
        %805 = vmatprep.subr.mxu0 0.0
        %806 = vmatpush1.msra.mxu0 0.0
        %807 = vmatprep.subr.mxu0 0.0
        %808 = vmatpush1.msra.mxu0 0.0
        %809 = vmatprep.subr.mxu0 0.0
        %810 = vmatpush1.msra.mxu0 0.0
        %811 = vmatprep.subr.mxu0 0.0
        %812 = vmatpush1.msra.mxu0 0.0
        %813 = vmatprep.subr.mxu0 0.0
        %814 = vmatpush1.msra.mxu0 0.0
        %815 = vmatprep.subr.mxu0 0.0
        %816 = vmatpush1.msra.mxu0 0.0
        %817 = vmatprep.subr.mxu0 0.0
        %818 = vmatpush1.msra.mxu0 0.0
        %819 = vmatprep.subr.mxu0 0.0
        %820 = vmatpush1.msra.mxu0 0.0
        %821 = vmatprep.subr.mxu0 0.0
        %822 = vmatpush1.msra.mxu0 0.0
        %823 = vmatprep.subr.mxu0 0.0
        %824 = vmatpush1.msra.mxu0 0.0
        %825 = vmatprep.subr.mxu0 0.0
        %826 = vmatpush1.msra.mxu0 0.0
        %827 = vmatprep.subr.mxu0 0.0
        %828 = vmatpush1.msra.mxu0 0.0
        %829 = vmatprep.subr.mxu0 0.0
        %830 = vmatpush1.msra.mxu0 0.0
        %831 = vmatprep.subr.mxu0 0.0
        %832 = vmatpush1.msra.mxu0 0.0
        %833 = vmatprep.subr.mxu0 0.0
        %834 = vmatpush1.msra.mxu0 0.0
        %835 = vmatprep.subr.mxu0 0.0
        %836 = vmatpush1.msra.mxu0 0.0
        %837 = vmatprep.subr.mxu0 0.0
        %838 = vmatpush1.msra.mxu0 0.0
        %839 = vmatprep.subr.mxu0 0.0
        %840 = vmatpush1.msra.mxu0 0.0
        %841 = vmatprep.subr.mxu0 0.0
        %842 = vmatpush1.msra.mxu0 0.0
        %843 = vmatprep.subr.mxu0 0.0
        %844 = vmatpush1.msra.mxu0 0.0
        %845 = vmatprep.subr.mxu0 0.0
        %846 = vmatpush1.msra.mxu0 0.0
        %847 = vmatprep.subr.mxu0 0.0
        %848 = vmatpush1.msra.mxu0 0.0
        %849 = vmatprep.subr.mxu0 0.0
        %850 = vmatpush1.msra.mxu0 0.0
        %851 = vmatprep.subr.mxu0 0.0
        %852 = vmatpush1.msra.mxu0 0.0
        %853 = vmatprep.subr.mxu0 0.0
        %854 = vmatpush1.msra.mxu0 0.0
        %855 = vmatprep.subr.mxu0 0.0
        %856 = vmatpush1.msra.mxu0 0.0
        %857 = vmatprep.mubr.f32.mxu0 0.0
        %858 = vmatmul.mubr.f32.gmra.mrb[0].mxu0 %v791
        %v859 = vpop.f32.mrb[0].mxu0
        %v860 = vadd.f32 1e-05, %v859
        %v861 = vpop.f32.mrb[0].mxu0
        %862 = vdwg.mxu0
        %v863 = vrsqrt.pop %v860
        %v864 = vld [vmem:[%s3] sm:$0x1]
        %v865 = vmul.f32 %v863, %v864
        %v866 = vld [vmem:[%s4] sm:$0x1]
        %v867 = vmul.f32 %v682, %v865
        %v868 = vsub.f32 %v866, %v867
        %v869 = vlaneseq
        %v870 = vshrl.u32 %v869, 7
        %v871 = vsub.s32 0, %v870
        %v872 = vrot.slane %v865, %v871
        %v873 = vmul.f32 %v499, %v872
        %v874 = vmul.f32 %v500, %v872
        %v875 = vmul.f32 %v501, %v872
        %v876 = vmul.f32 %v502, %v872
        %v877 = vmul.f32 %v503, %v872
        %v878 = vmul.f32 %v504, %v872
        %v879 = vmul.f32 %v505, %v872
        %v880 = vmul.f32 %v506, %v872
        %v882 = vlaneseq
        %v883 = vshrl.u32 %v882, 7
        %v884 = vsub.s32 0, %v883
        %v885 = vrot.slane %v868, %v884
        %v887 = vadd.f32 %v873, %v885
        %v888 = vadd.f32 %v874, %v885
        %v889 = vadd.f32 %v875, %v885
        %v890 = vadd.f32 %v876, %v885
        %v891 = vadd.f32 %v877, %v885
        %v892 = vadd.f32 %v878, %v885
        %v893 = vadd.f32 %v879, %v885
        %v894 = vadd.f32 %v880, %v885
        %v895 = vpack.c.bf16 %v888, %v887
        %v896 = vpack.c.bf16 %v890, %v889
        %v897 = vpack.c.bf16 %v892, %v891
        %v898 = vpack.c.bf16 %v894, %v893
        %v899 = vld [vmem:[#allocation2] sm:$0xf]
        %v900 = vld [vmem:[#allocation2 + $0x4] sm:$0xf]
        %v901 = vld [vmem:[#allocation2 + $0x8] sm:$0xf]
        %v902 = vld [vmem:[#allocation2 + $0xc] sm:$0xf]
        %v903 = vld [vmem:[#allocation2 + $0x10] sm:$0xf]
        %v904 = vld [vmem:[#allocation2 + $0x14] sm:$0xf]
        %v905 = vld [vmem:[#allocation2 + $0x18] sm:$0xf]
        %v906 = vld [vmem:[#allocation2 + $0x1c] sm:$0xf]
        %v907 = vld [vmem:[#allocation2 + $0x20] sm:$0xf]
        %v908 = vld [vmem:[#allocation2 + $0x24] sm:$0xf]
        %v909 = vld [vmem:[#allocation2 + $0x28] sm:$0xf]
        %v910 = vld [vmem:[#allocation2 + $0x2c] sm:$0xf]
        %v911 = vld [vmem:[#allocation2 + $0x30] sm:$0xf]
        %v912 = vld [vmem:[#allocation2 + $0x34] sm:$0xf]
        %v913 = vld [vmem:[#allocation2 + $0x38] sm:$0xf]
        %v914 = vld [vmem:[#allocation2 + $0x3c] sm:$0xf]
        %v915 = vld [vmem:[%s8] sm:$0x1]
        %v917 = vlaneseq
        %v918 = vshrl.u32 %v917, 7
        %v919 = vsub.s32 0, %v918
        %v920 = vrot.slane %v915, %v919
        %v938 = vunpack.c.l.b16 %v899
        %v939 = vunpack.c.l.b16 %v900
        %v940 = vunpack.c.l.b16 %v901
        %v941 = vunpack.c.l.b16 %v902
        %v942 = vunpack.c.l.b16 %v903
        %v943 = vunpack.c.l.b16 %v904
        %v944 = vunpack.c.l.b16 %v905
        %v945 = vunpack.c.l.b16 %v906
        %v946 = vunpack.c.l.b16 %v907
        %v947 = vunpack.c.l.b16 %v908
        %v948 = vunpack.c.l.b16 %v909
        %v949 = vunpack.c.l.b16 %v910
        %v950 = vunpack.c.l.b16 %v911
        %v951 = vunpack.c.l.b16 %v912
        %v952 = vunpack.c.l.b16 %v913
        %v953 = vunpack.c.l.b16 %v914
        %v954 = vpack.c.b16 %v939, %v938
        %v955 = vpack.c.b16 %v941, %v940
        %v956 = vpack.c.b16 %v943, %v942
        %v957 = vpack.c.b16 %v945, %v944
        %v958 = vpack.c.b16 %v947, %v946
        %v959 = vpack.c.b16 %v949, %v948
        %v960 = vpack.c.b16 %v951, %v950
        %v961 = vpack.c.b16 %v953, %v952
        %970 = vmatprep.subr.bf16.mxu0 0
        %971 = vmatpush1.bf16.msra.mxu0 %v954
        %972 = vmatprep.subr.bf16.mxu0 0
        %973 = vmatpush1.bf16.msra.mxu0 %v955
        %974 = vmatprep.subr.bf16.mxu0 0
        %975 = vmatpush1.bf16.msra.mxu0 %v956
        %976 = vmatprep.subr.bf16.mxu0 0
        %977 = vmatpush1.bf16.msra.mxu0 %v957
        %978 = vmatprep.subr.bf16.mxu0 0
        %979 = vmatpush1.bf16.msra.mxu0 %v958
        %980 = vmatprep.subr.bf16.mxu0 0
        %981 = vmatpush1.bf16.msra.mxu0 %v959
        %982 = vmatprep.subr.bf16.mxu0 0
        %983 = vmatpush1.bf16.msra.mxu0 %v960
        %984 = vmatprep.subr.bf16.mxu0 0
        %985 = vmatpush1.bf16.msra.mxu0 %v961
        %986 = vmatprep.subr.bf16.mxu0 0
        %987 = vmatpush1.bf16.msra.mxu0 0
        %988 = vmatprep.subr.bf16.mxu0 0
        %989 = vmatpush1.bf16.msra.mxu0 0
        %990 = vmatprep.subr.bf16.mxu0 0
        %991 = vmatpush1.bf16.msra.mxu0 0
        %992 = vmatprep.subr.bf16.mxu0 0
        %993 = vmatpush1.bf16.msra.mxu0 0
        %994 = vmatprep.subr.bf16.mxu0 0
        %995 = vmatpush1.bf16.msra.mxu0 0
        %996 = vmatprep.subr.bf16.mxu0 0
        %997 = vmatpush1.bf16.msra.mxu0 0
        %998 = vmatprep.subr.bf16.mxu0 0
        %999 = vmatpush1.bf16.msra.mxu0 0
        %1000 = vmatprep.subr.bf16.mxu0 0
        %1001 = vmatpush1.bf16.msra.mxu0 0
        %1002 = vmatprep.mubr.bf16.mxu0 0
        %1003 = vmatmul.mubr.bf16.gmra.mrb[0].mxu0 %v895
        %v1004 = vpop.f32.mrb[0].mxu0
        %v1005 = vadd.f32 %v920, %v1004
        %v1006 = vpop.f32.mrb[0].mxu0
        %v1007 = vpop.f32.mrb[0].mxu0
        %v1008 = vadd.f32 %v920, %v1007
        %v1009 = vpop.f32.mrb[0].mxu0
        %1010 = vmatprep.mubr.bf16.mxu0 0
        %1011 = vmatmul.mubr.bf16.gmra.mrb[0].mxu0 %v896
        %v1012 = vpop.f32.mrb[0].mxu0
        %v1013 = vadd.f32 %v920, %v1012
        %v1014 = vpop.f32.mrb[0].mxu0
        %v1015 = vpop.f32.mrb[0].mxu0
        %v1016 = vadd.f32 %v920, %v1015
        %v1017 = vpop.f32.mrb[0].mxu0
        %1018 = vmatprep.mubr.bf16.mxu0 0
        %1019 = vmatmul.mubr.bf16.gmra.mrb[0].mxu0 %v897
        %v1020 = vpop.f32.mrb[0].mxu0
        %v1021 = vadd.f32 %v920, %v1020
        %v1022 = vpop.f32.mrb[0].mxu0
        %v1023 = vpop.f32.mrb[0].mxu0
        %v1024 = vadd.f32 %v920, %v1023
        %v1025 = vpop.f32.mrb[0].mxu0
        %1026 = vmatprep.mubr.bf16.mxu0 0
        %1027 = vmatmul.mubr.bf16.gmra.mrb[0].mxu0 %v898
        %v1028 = vpop.f32.mrb[0].mxu0
        %v1029 = vadd.f32 %v920, %v1028
        %v1030 = vpop.f32.mrb[0].mxu0
        %v1031 = vpop.f32.mrb[0].mxu0
        %v1032 = vadd.f32 %v920, %v1031
        %v1033 = vpop.f32.mrb[0].mxu0
        %1034 = vdwg.mxu0
        %v1035 = vpack.c.bf16 %v1008, %v1005
        %v1036 = vpack.c.bf16 %v1016, %v1013
        %v1037 = vpack.c.bf16 %v1024, %v1021
        %v1038 = vpack.c.bf16 %v1032, %v1029
        %v1039 = vld [vmem:[#allocation5] sm:$0xf]
        %v1040 = vld [vmem:[#allocation5 + $0x4] sm:$0xf]
        %v1041 = vld [vmem:[#allocation5 + $0x8] sm:$0xf]
        %v1042 = vld [vmem:[#allocation5 + $0xc] sm:$0xf]
        %v1043 = vld [vmem:[#allocation5 + $0x10] sm:$0xf]
        %v1044 = vld [vmem:[#allocation5 + $0x14] sm:$0xf]
        %v1045 = vld [vmem:[#allocation5 + $0x18] sm:$0xf]
        %v1046 = vld [vmem:[#allocation5 + $0x1c] sm:$0xf]
        %v1047 = vld [vmem:[#allocation5 + $0x20] sm:$0xf]
        %v1048 = vld [vmem:[#allocation5 + $0x24] sm:$0xf]
        %v1049 = vld [vmem:[#allocation5 + $0x28] sm:$0xf]
        %v1050 = vld [vmem:[#allocation5 + $0x2c] sm:$0xf]
        %v1051 = vld [vmem:[#allocation5 + $0x30] sm:$0xf]
        %v1052 = vld [vmem:[#allocation5 + $0x34] sm:$0xf]
        %v1053 = vld [vmem:[#allocation5 + $0x38] sm:$0xf]
        %v1054 = vld [vmem:[#allocation5 + $0x3c] sm:$0xf]
        %v1055 = vld [vmem:[%s9] sm:$0x1]
        %v1057 = vlaneseq
        %v1058 = vshrl.u32 %v1057, 7
        %v1059 = vsub.s32 0, %v1058
        %v1060 = vrot.slane %v1055, %v1059
        %v1078 = vunpack.c.l.b16 %v1039
        %v1079 = vunpack.c.l.b16 %v1040
        %v1080 = vunpack.c.l.b16 %v1041
        %v1081 = vunpack.c.l.b16 %v1042
        %v1082 = vunpack.c.l.b16 %v1043
        %v1083 = vunpack.c.l.b16 %v1044
        %v1084 = vunpack.c.l.b16 %v1045
        %v1085 = vunpack.c.l.b16 %v1046
        %v1086 = vunpack.c.l.b16 %v1047
        %v1087 = vunpack.c.l.b16 %v1048
        %v1088 = vunpack.c.l.b16 %v1049
        %v1089 = vunpack.c.l.b16 %v1050
        %v1090 = vunpack.c.l.b16 %v1051
        %v1091 = vunpack.c.l.b16 %v1052
        %v1092 = vunpack.c.l.b16 %v1053
        %v1093 = vunpack.c.l.b16 %v1054
        %v1094 = vpack.c.b16 %v1079, %v1078
        %v1095 = vpack.c.b16 %v1081, %v1080
        %v1096 = vpack.c.b16 %v1083, %v1082
        %v1097 = vpack.c.b16 %v1085, %v1084
        %v1098 = vpack.c.b16 %v1087, %v1086
        %v1099 = vpack.c.b16 %v1089, %v1088
        %v1100 = vpack.c.b16 %v1091, %v1090
        %v1101 = vpack.c.b16 %v1093, %v1092
        %1110 = vmatprep.subr.bf16.mxu0 0
        %1111 = vmatpush1.bf16.msra.mxu0 %v1094
        %1112 = vmatprep.subr.bf16.mxu0 0
        %1113 = vmatpush1.bf16.msra.mxu0 %v1095
        %1114 = vmatprep.subr.bf16.mxu0 0
        %1115 = vmatpush1.bf16.msra.mxu0 %v1096
        %1116 = vmatprep.subr.bf16.mxu0 0
        %1117 = vmatpush1.bf16.msra.mxu0 %v1097
        %1118 = vmatprep.subr.bf16.mxu0 0
        %1119 = vmatpush1.bf16.msra.mxu0 %v1098
        %1120 = vmatprep.subr.bf16.mxu0 0
        %1121 = vmatpush1.bf16.msra.mxu0 %v1099
        %1122 = vmatprep.subr.bf16.mxu0 0
        %1123 = vmatpush1.bf16.msra.mxu0 %v1100
        %1124 = vmatprep.subr.bf16.mxu0 0
        %1125 = vmatpush1.bf16.msra.mxu0 %v1101
        %1126 = vmatprep.subr.bf16.mxu0 0
        %1127 = vmatpush1.bf16.msra.mxu0 0
        %1128 = vmatprep.subr.bf16.mxu0 0
        %1129 = vmatpush1.bf16.msra.mxu0 0
        %1130 = vmatprep.subr.bf16.mxu0 0
        %1131 = vmatpush1.bf16.msra.mxu0 0
        %1132 = vmatprep.subr.bf16.mxu0 0
        %1133 = vmatpush1.bf16.msra.mxu0 0
        %1134 = vmatprep.subr.bf16.mxu0 0
        %1135 = vmatpush1.bf16.msra.mxu0 0
        %1136 = vmatprep.subr.bf16.mxu0 0
        %1137 = vmatpush1.bf16.msra.mxu0 0
        %1138 = vmatprep.subr.bf16.mxu0 0
        %1139 = vmatpush1.bf16.msra.mxu0 0
        %1140 = vmatprep.subr.bf16.mxu0 0
        %1141 = vmatpush1.bf16.msra.mxu0 0
        %1142 = vmatprep.mubr.bf16.mxu0 0
        %1143 = vmatmul.mubr.bf16.gmra.mrb[0].mxu0 %v895
        %v1144 = vpop.f32.mrb[0].mxu0
        %v1145 = vadd.f32 %v1060, %v1144
        %v1146 = vpop.f32.mrb[0].mxu0
        %v1147 = vpop.f32.mrb[0].mxu0
        %v1148 = vadd.f32 %v1060, %v1147
        %v1149 = vpop.f32.mrb[0].mxu0
        %1150 = vmatprep.mubr.bf16.mxu0 0
        %1151 = vmatmul.mubr.bf16.gmra.mrb[0].mxu0 %v896
        %v1152 = vpop.f32.mrb[0].mxu0
        %v1153 = vadd.f32 %v1060, %v1152
        %v1154 = vpop.f32.mrb[0].mxu0
        %v1155 = vpop.f32.mrb[0].mxu0
        %v1156 = vadd.f32 %v1060, %v1155
        %v1157 = vpop.f32.mrb[0].mxu0
        %1158 = vmatprep.mubr.bf16.mxu0 0
        %1159 = vmatmul.mubr.bf16.gmra.mrb[0].mxu0 %v897
        %v1160 = vpop.f32.mrb[0].mxu0
        %v1161 = vadd.f32 %v1060, %v1160
        %v1162 = vpop.f32.mrb[0].mxu0
        %v1163 = vpop.f32.mrb[0].mxu0
        %v1164 = vadd.f32 %v1060, %v1163
        %v1165 = vpop.f32.mrb[0].mxu0
        %1166 = vmatprep.mubr.bf16.mxu0 0
        %1167 = vmatmul.mubr.bf16.gmra.mrb[0].mxu0 %v898
        %v1168 = vpop.f32.mrb[0].mxu0
        %v1169 = vadd.f32 %v1060, %v1168
        %v1170 = vpop.f32.mrb[0].mxu0
        %v1171 = vpop.f32.mrb[0].mxu0
        %v1172 = vadd.f32 %v1060, %v1171
        %v1173 = vpop.f32.mrb[0].mxu0
        %1174 = vdwg.mxu0
        %v1175 = vpack.c.bf16 %v1148, %v1145
        %v1176 = vpack.c.bf16 %v1156, %v1153
        %v1177 = vpack.c.bf16 %v1164, %v1161
        %v1178 = vpack.c.bf16 %v1172, %v1169
        %v1179 = vld [vmem:[#allocation7] sm:$0xf]
        %v1180 = vld [vmem:[#allocation7 + $0x4] sm:$0xf]
        %v1181 = vld [vmem:[#allocation7 + $0x8] sm:$0xf]
        %v1182 = vld [vmem:[#allocation7 + $0xc] sm:$0xf]
        %v1183 = vld [vmem:[#allocation7 + $0x10] sm:$0xf]
        %v1184 = vld [vmem:[#allocation7 + $0x14] sm:$0xf]
        %v1185 = vld [vmem:[#allocation7 + $0x18] sm:$0xf]
        %v1186 = vld [vmem:[#allocation7 + $0x1c] sm:$0xf]
        %v1187 = vld [vmem:[#allocation7 + $0x20] sm:$0xf]
        %v1188 = vld [vmem:[#allocation7 + $0x24] sm:$0xf]
        %v1189 = vld [vmem:[#allocation7 + $0x28] sm:$0xf]
        %v1190 = vld [vmem:[#allocation7 + $0x2c] sm:$0xf]
        %v1191 = vld [vmem:[#allocation7 + $0x30] sm:$0xf]
        %v1192 = vld [vmem:[#allocation7 + $0x34] sm:$0xf]
        %v1193 = vld [vmem:[#allocation7 + $0x38] sm:$0xf]
        %v1194 = vld [vmem:[#allocation7 + $0x3c] sm:$0xf]
        %v1195 = vld [vmem:[%s10] sm:$0x1]
        %v1197 = vlaneseq
        %v1198 = vshrl.u32 %v1197, 7
        %v1199 = vsub.s32 0, %v1198
        %v1200 = vrot.slane %v1195, %v1199
        %v1218 = vunpack.c.l.b16 %v1179
        %v1219 = vunpack.c.l.b16 %v1180
        %v1220 = vunpack.c.l.b16 %v1181
        %v1221 = vunpack.c.l.b16 %v1182
        %v1222 = vunpack.c.l.b16 %v1183
        %v1223 = vunpack.c.l.b16 %v1184
        %v1224 = vunpack.c.l.b16 %v1185
        %v1225 = vunpack.c.l.b16 %v1186
        %v1226 = vunpack.c.l.b16 %v1187
        %v1227 = vunpack.c.l.b16 %v1188
        %v1228 = vunpack.c.l.b16 %v1189
        %v1229 = vunpack.c.l.b16 %v1190
        %v1230 = vunpack.c.l.b16 %v1191
        %v1231 = vunpack.c.l.b16 %v1192
        %v1232 = vunpack.c.l.b16 %v1193
        %v1233 = vunpack.c.l.b16 %v1194
        %v1234 = vpack.c.b16 %v1219, %v1218
        %v1235 = vpack.c.b16 %v1221, %v1220
        %v1236 = vpack.c.b16 %v1223, %v1222
        %v1237 = vpack.c.b16 %v1225, %v1224
        %v1238 = vpack.c.b16 %v1227, %v1226
        %v1239 = vpack.c.b16 %v1229, %v1228
        %v1240 = vpack.c.b16 %v1231, %v1230
        %v1241 = vpack.c.b16 %v1233, %v1232
        %1250 = vmatprep.subr.bf16.mxu0 0
        %1251 = vmatpush1.bf16.msra.mxu0 %v1234
        %1252 = vmatprep.subr.bf16.mxu0 0
        %1253 = vmatpush1.bf16.msra.mxu0 %v1235
        %1254 = vmatprep.subr.bf16.mxu0 0
        %1255 = vmatpush1.bf16.msra.mxu0 %v1236
        %1256 = vmatprep.subr.bf16.mxu0 0
        %1257 = vmatpush1.bf16.msra.mxu0 %v1237
        %1258 = vmatprep.subr.bf16.mxu0 0
        %1259 = vmatpush1.bf16.msra.mxu0 %v1238
        %1260 = vmatprep.subr.bf16.mxu0 0
        %1261 = vmatpush1.bf16.msra.mxu0 %v1239
        %1262 = vmatprep.subr.bf16.mxu0 0
        %1263 = vmatpush1.bf16.msra.mxu0 %v1240
        %1264 = vmatprep.subr.bf16.mxu0 0
        %1265 = vmatpush1.bf16.msra.mxu0 %v1241
        %1266 = vmatprep.subr.bf16.mxu0 0
        %1267 = vmatpush1.bf16.msra.mxu0 0
        %1268 = vmatprep.subr.bf16.mxu0 0
        %1269 = vmatpush1.bf16.msra.mxu0 0
        %1270 = vmatprep.subr.bf16.mxu0 0
        %1271 = vmatpush1.bf16.msra.mxu0 0
        %1272 = vmatprep.subr.bf16.mxu0 0
        %1273 = vmatpush1.bf16.msra.mxu0 0
        %1274 = vmatprep.subr.bf16.mxu0 0
        %1275 = vmatpush1.bf16.msra.mxu0 0
        %1276 = vmatprep.subr.bf16.mxu0 0
        %1277 = vmatpush1.bf16.msra.mxu0 0
        %1278 = vmatprep.subr.bf16.mxu0 0
        %1279 = vmatpush1.bf16.msra.mxu0 0
        %1280 = vmatprep.subr.bf16.mxu0 0
        %1281 = vmatpush1.bf16.msra.mxu0 0
        %1282 = vmatprep.mubr.bf16.mxu0 0
        %1283 = vmatmul.mubr.bf16.gmra.mrb[0].mxu0 %v895
        %v1284 = vpop.f32.mrb[0].mxu0
        %v1285 = vadd.f32 %v1200, %v1284
        %v1286 = vpop.f32.mrb[0].mxu0
        %v1287 = vpop.f32.mrb[0].mxu0
        %v1288 = vadd.f32 %v1200, %v1287
        %v1289 = vpop.f32.mrb[0].mxu0
        %1290 = vmatprep.mubr.bf16.mxu0 0
        %1291 = vmatmul.mubr.bf16.gmra.mrb[0].mxu0 %v896
        %v1292 = vpop.f32.mrb[0].mxu0
        %v1293 = vadd.f32 %v1200, %v1292
        %v1294 = vpop.f32.mrb[0].mxu0
        %v1295 = vpop.f32.mrb[0].mxu0
        %v1296 = vadd.f32 %v1200, %v1295
        %v1297 = vpop.f32.mrb[0].mxu0
        %1298 = vmatprep.mubr.bf16.mxu0 0
        %1299 = vmatmul.mubr.bf16.gmra.mrb[0].mxu0 %v897
        %v1300 = vpop.f32.mrb[0].mxu0
        %v1301 = vadd.f32 %v1200, %v1300
        %v1302 = vpop.f32.mrb[0].mxu0
        %v1303 = vpop.f32.mrb[0].mxu0
        %v1304 = vadd.f32 %v1200, %v1303
        %v1305 = vpop.f32.mrb[0].mxu0
        %1306 = vmatprep.mubr.bf16.mxu0 0
        %1307 = vmatmul.mubr.bf16.gmra.mrb[0].mxu0 %v898
        %v1308 = vpop.f32.mrb[0].mxu0
        %v1309 = vadd.f32 %v1200, %v1308
        %v1310 = vpop.f32.mrb[0].mxu0
        %v1311 = vpop.f32.mrb[0].mxu0
        %v1312 = vadd.f32 %v1200, %v1311
        %v1313 = vpop.f32.mrb[0].mxu0
        %1314 = vdwg.mxu0
        %v1315 = vpack.c.bf16 %v1288, %v1285
        %v1316 = vpack.c.bf16 %v1296, %v1293
        %v1317 = vpack.c.bf16 %v1304, %v1301
        %v1318 = vpack.c.bf16 %v1312, %v1309
        %1319 = vmatprep.subr.bf16.mxu0 0
        %1320 = vmatpush1.bf16.xpose.msra.mxu0 %v1175
        %1321 = vmatprep.subr.bf16.mxu0 0
        %1322 = vmatpush1.bf16.xpose.msra.mxu0 %v1176
        %1323 = vmatprep.subr.bf16.mxu0 0
        %1324 = vmatpush1.bf16.xpose.msra.mxu0 %v1177
        %1325 = vmatprep.subr.bf16.mxu0 0
        %1326 = vmatpush1.bf16.xpose.msra.mxu0 %v1178
        %1327 = vmatprep.subr.bf16.mxu0 0
        %1328 = vmatpush1.bf16.xpose.msra.mxu0 0
        %1329 = vmatprep.subr.bf16.mxu0 0
        %1330 = vmatpush1.bf16.xpose.msra.mxu0 0
        %1331 = vmatprep.subr.bf16.mxu0 0
        %1332 = vmatpush1.bf16.xpose.msra.mxu0 0
        %1333 = vmatprep.subr.bf16.mxu0 0
        %1334 = vmatpush1.bf16.xpose.msra.mxu0 0
        %1335 = vmatprep.subr.bf16.mxu0 0
        %1336 = vmatpush1.bf16.xpose.msra.mxu0 0
        %1337 = vmatprep.subr.bf16.mxu0 0
        %1338 = vmatpush1.bf16.xpose.msra.mxu0 0
        %1339 = vmatprep.subr.bf16.mxu0 0
        %1340 = vmatpush1.bf16.xpose.msra.mxu0 0
        %1341 = vmatprep.subr.bf16.mxu0 0
        %1342 = vmatpush1.bf16.xpose.msra.mxu0 0
        %1343 = vmatprep.subr.bf16.mxu0 0
        %1344 = vmatpush1.bf16.xpose.msra.mxu0 0
        %1345 = vmatprep.subr.bf16.mxu0 0
        %1346 = vmatpush1.bf16.xpose.msra.mxu0 0
        %1347 = vmatprep.subr.bf16.mxu0 0
        %1348 = vmatpush1.bf16.xpose.msra.mxu0 0
        %1349 = vmatprep.subr.bf16.mxu0 0
        %1350 = vmatpush1.bf16.xpose.msra.mxu0 0
        %1351 = vmatprep.mubr.bf16.mxu0 0
        %1352 = vmatmul.mubr.bf16.gmra.mrb[0].mxu0 %v1035
        %v1353 = vpop.f32.mrb[0].mxu0
        %v1354 = vadd.f32 0.0, %v1353
        %v1355 = vpop.f32.mrb[0].mxu0
        %v1356 = vpop.f32.mrb[0].mxu0
        %v1357 = vadd.f32 0.0, %v1356
        %v1358 = vpop.f32.mrb[0].mxu0
        %1359 = vmatprep.mubr.bf16.mxu0 0
        %1360 = vmatmul.mubr.bf16.gmra.mrb[0].mxu0 %v1036
        %v1361 = vpop.f32.mrb[0].mxu0
        %v1362 = vadd.f32 0.0, %v1361
        %v1363 = vpop.f32.mrb[0].mxu0
        %v1364 = vpop.f32.mrb[0].mxu0
        %v1365 = vadd.f32 0.0, %v1364
        %v1366 = vpop.f32.mrb[0].mxu0
        %1367 = vmatprep.mubr.bf16.mxu0 0
        %1368 = vmatmul.mubr.bf16.gmra.mrb[0].mxu0 %v1037
        %v1369 = vpop.f32.mrb[0].mxu0
        %v1370 = vadd.f32 0.0, %v1369
        %v1371 = vpop.f32.mrb[0].mxu0
        %v1372 = vpop.f32.mrb[0].mxu0
        %v1373 = vadd.f32 0.0, %v1372
        %v1374 = vpop.f32.mrb[0].mxu0
        %1375 = vmatprep.mubr.bf16.mxu0 0
        %1376 = vmatmul.mubr.bf16.gmra.mrb[0].mxu0 %v1038
        %v1377 = vpop.f32.mrb[0].mxu0
        %v1378 = vadd.f32 0.0, %v1377
        %v1379 = vpop.f32.mrb[0].mxu0
        %v1380 = vpop.f32.mrb[0].mxu0
        %v1381 = vadd.f32 0.0, %v1380
        %v1382 = vpop.f32.mrb[0].mxu0
        %1383 = vdwg.mxu0
        %vm1384 = vcmask 523264
        %v1385 = vsel %vm1384, %v1354, -inf
        %1386 = vmax.xlane.f32.xlu0 %v1385
        %v1387 = vpop.xlane.xlu0 %1386
        %v1388 = vsel %vm1384, %v1357, -inf
        %1389 = vmax.xlane.f32.xlu0 %v1388
        %v1390 = vpop.xlane.xlu0 %1389
        %v1391 = vsel %vm1384, %v1362, -inf
        %1392 = vmax.xlane.f32.xlu0 %v1391
        %v1393 = vpop.xlane.xlu0 %1392
        %v1394 = vsel %vm1384, %v1365, -inf
        %1395 = vmax.xlane.f32.xlu0 %v1394
        %v1396 = vpop.xlane.xlu0 %1395
        %v1397 = vsel %vm1384, %v1370, -inf
        %1398 = vmax.xlane.f32.xlu0 %v1397
        %v1399 = vpop.xlane.xlu0 %1398
        %v1400 = vsel %vm1384, %v1373, -inf
        %1401 = vmax.xlane.f32.xlu0 %v1400
        %v1402 = vpop.xlane.xlu0 %1401
        %v1403 = vsel %vm1384, %v1378, -inf
        %1404 = vmax.xlane.f32.xlu0 %v1403
        %v1405 = vpop.xlane.xlu0 %1404
        %v1406 = vsel %vm1384, %v1381, -inf
        %1407 = vmax.xlane.f32.xlu0 %v1406
        %v1408 = vpop.xlane.xlu0 %1407
        %v1409 = vsub.f32 %v1354, %v1387
        %v1410 = vsub.f32 %v1357, %v1390
        %v1411 = vsub.f32 %v1362, %v1393
        %v1412 = vsub.f32 %v1365, %v1396
        %v1413 = vsub.f32 %v1370, %v1399
        %v1414 = vsub.f32 %v1373, %v1402
        %v1415 = vsub.f32 %v1378, %v1405
        %v1416 = vsub.f32 %v1381, %v1408
        %v1417 = vmul.f32 %v1409, 1.442695
        %v1418 = vpow.pop %v1417
        %v1419 = vmul.f32 %v1410, 1.442695
        %v1420 = vpow.pop %v1419
        %v1421 = vmul.f32 %v1411, 1.442695
        %v1422 = vpow.pop %v1421
        %v1423 = vmul.f32 %v1412, 1.442695
        %v1424 = vpow.pop %v1423
        %v1425 = vmul.f32 %v1413, 1.442695
        %v1426 = vpow.pop %v1425
        %v1427 = vmul.f32 %v1414, 1.442695
        %v1428 = vpow.pop %v1427
        %v1429 = vmul.f32 %v1415, 1.442695
        %v1430 = vpow.pop %v1429
        %v1431 = vmul.f32 %v1416, 1.442695
        %v1432 = vpow.pop %v1431
        %v1433 = vsel %vm1384, %v1418, 0.0
        %1434 = vadd.xlane.f32.xlu0 %v1433
        %v1435 = vpop.xlane.xlu0 %1434
        %v1436 = vsel %vm1384, %v1420, 0.0
        %1437 = vadd.xlane.f32.xlu0 %v1436
        %v1438 = vpop.xlane.xlu0 %1437
        %v1439 = vsel %vm1384, %v1422, 0.0
        %1440 = vadd.xlane.f32.xlu0 %v1439
        %v1441 = vpop.xlane.xlu0 %1440
        %v1442 = vsel %vm1384, %v1424, 0.0
        %1443 = vadd.xlane.f32.xlu0 %v1442
        %v1444 = vpop.xlane.xlu0 %1443
        %v1445 = vsel %vm1384, %v1426, 0.0
        %1446 = vadd.xlane.f32.xlu0 %v1445
        %v1447 = vpop.xlane.xlu0 %1446
        %v1448 = vsel %vm1384, %v1428, 0.0
        %1449 = vadd.xlane.f32.xlu0 %v1448
        %v1450 = vpop.xlane.xlu0 %1449
        %v1451 = vsel %vm1384, %v1430, 0.0
        %1452 = vadd.xlane.f32.xlu0 %v1451
        %v1453 = vpop.xlane.xlu0 %1452
        %v1454 = vsel %vm1384, %v1432, 0.0
        %1455 = vadd.xlane.f32.xlu0 %v1454
        %v1456 = vpop.xlane.xlu0 %1455
        %v1457 = vpack.c.bf16 %v1420, %v1418
        %v1458 = vpack.c.bf16 %v1424, %v1422
        %v1459 = vpack.c.bf16 %v1428, %v1426
        %v1460 = vpack.c.bf16 %v1432, %v1430
        %v1462 = vsel %vm1384, %v1457, 0
        %v1465 = vsel %vm1384, %v1458, 0
        %v1468 = vsel %vm1384, %v1459, 0
        %v1471 = vsel %vm1384, %v1460, 0
        %1473 = vmatprep.subr.bf16.mxu0 0
        %1474 = vmatpush1.bf16.msra.mxu0 %v1315
        %1475 = vmatprep.subr.bf16.mxu0 0
        %1476 = vmatpush1.bf16.msra.mxu0 %v1316
        %1477 = vmatprep.subr.bf16.mxu0 0
        %1478 = vmatpush1.bf16.msra.mxu0 %v1317
        %1479 = vmatprep.subr.bf16.mxu0 0
        %1480 = vmatpush1.bf16.msra.mxu0 %v1318
        %1481 = vmatprep.subr.bf16.mxu0 0
        %1482 = vmatpush1.bf16.msra.mxu0 0
        %1483 = vmatprep.subr.bf16.mxu0 0
        %1484 = vmatpush1.bf16.msra.mxu0 0
        %1485 = vmatprep.subr.bf16.mxu0 0
        %1486 = vmatpush1.bf16.msra.mxu0 0
        %1487 = vmatprep.subr.bf16.mxu0 0
        %1488 = vmatpush1.bf16.msra.mxu0 0
        %1489 = vmatprep.subr.bf16.mxu0 0
        %1490 = vmatpush1.bf16.msra.mxu0 0
        %1491 = vmatprep.subr.bf16.mxu0 0
        %1492 = vmatpush1.bf16.msra.mxu0 0
        %1493 = vmatprep.subr.bf16.mxu0 0
        %1494 = vmatpush1.bf16.msra.mxu0 0
        %1495 = vmatprep.subr.bf16.mxu0 0
        %1496 = vmatpush1.bf16.msra.mxu0 0
        %1497 = vmatprep.subr.bf16.mxu0 0
        %1498 = vmatpush1.bf16.msra.mxu0 0
        %1499 = vmatprep.subr.bf16.mxu0 0
        %1500 = vmatpush1.bf16.msra.mxu0 0
        %1501 = vmatprep.subr.bf16.mxu0 0
        %1502 = vmatpush1.bf16.msra.mxu0 0
        %1503 = vmatprep.subr.bf16.mxu0 0
        %1504 = vmatpush1.bf16.msra.mxu0 0
        %1505 = vmatprep.mubr.bf16.mxu0 0
        %1506 = vmatmul.mubr.bf16.gmra.mrb[0].mxu0 %v1462
        %v1507 = vpop.f32.mrb[0].mxu0
        %v1508 = vadd.f32 0.0, %v1507
        %v1509 = vpop.f32.mrb[0].mxu0
        %v1510 = vpop.f32.mrb[0].mxu0
        %v1511 = vadd.f32 0.0, %v1510
        %v1512 = vpop.f32.mrb[0].mxu0
        %1513 = vmatprep.mubr.bf16.mxu0 0
        %1514 = vmatmul.mubr.bf16.gmra.mrb[0].mxu0 %v1465
        %v1515 = vpop.f32.mrb[0].mxu0
        %v1516 = vadd.f32 0.0, %v1515
        %v1517 = vpop.f32.mrb[0].mxu0
        %v1518 = vpop.f32.mrb[0].mxu0
        %v1519 = vadd.f32 0.0, %v1518
        %v1520 = vpop.f32.mrb[0].mxu0
        %1521 = vmatprep.mubr.bf16.mxu0 0
        %1522 = vmatmul.mubr.bf16.gmra.mrb[0].mxu0 %v1468
        %v1523 = vpop.f32.mrb[0].mxu0
        %v1524 = vadd.f32 0.0, %v1523
        %v1525 = vpop.f32.mrb[0].mxu0
        %v1526 = vpop.f32.mrb[0].mxu0
        %v1527 = vadd.f32 0.0, %v1526
        %v1528 = vpop.f32.mrb[0].mxu0
        %1529 = vmatprep.mubr.bf16.mxu0 0
        %1530 = vmatmul.mubr.bf16.gmra.mrb[0].mxu0 %v1471
        %v1531 = vpop.f32.mrb[0].mxu0
        %v1532 = vadd.f32 0.0, %v1531
        %v1533 = vpop.f32.mrb[0].mxu0
        %v1534 = vpop.f32.mrb[0].mxu0
        %v1535 = vadd.f32 0.0, %v1534
        %v1536 = vpop.f32.mrb[0].mxu0
        %1537 = vdwg.mxu0
        %v1538 = vrcp.pop %v1435
        %v1539 = vrcp.pop %v1438
        %v1540 = vrcp.pop %v1441
        %v1541 = vrcp.pop %v1444
        %v1542 = vrcp.pop %v1447
        %v1543 = vrcp.pop %v1450
        %v1544 = vrcp.pop %v1453
        %v1545 = vrcp.pop %v1456
        %v1546 = vmul.f32 %v1508, %v1538
        %v1547 = vmul.f32 %v1511, %v1539
        %v1548 = vmul.f32 %v1516, %v1540
        %v1549 = vmul.f32 %v1519, %v1541
        %v1550 = vmul.f32 %v1524, %v1542
        %v1551 = vmul.f32 %v1527, %v1543
        %v1552 = vmul.f32 %v1532, %v1544
        %v1553 = vmul.f32 %v1535, %v1545
        %v1554 = vpack.c.bf16 %v1547, %v1546
        %v1555 = vpack.c.bf16 %v1549, %v1548
        %v1556 = vpack.c.bf16 %v1551, %v1550
        %v1557 = vpack.c.bf16 %v1553, %v1552
        %v1558 = vld [vmem:[#allocation8] sm:$0xf]
        %v1559 = vld [vmem:[#allocation8 + $0x4] sm:$0xf]
        %v1560 = vld [vmem:[#allocation8 + $0x8] sm:$0xf]
        %v1561 = vld [vmem:[#allocation8 + $0xc] sm:$0xf]
        %v1562 = vld [vmem:[#allocation8 + $0x10] sm:$0xf]
        %v1563 = vld [vmem:[#allocation8 + $0x14] sm:$0xf]
        %v1564 = vld [vmem:[#allocation8 + $0x18] sm:$0xf]
        %v1565 = vld [vmem:[#allocation8 + $0x1c] sm:$0xf]
        %v1566 = vld [vmem:[#allocation8 + $0x20] sm:$0xf]
        %v1567 = vld [vmem:[#allocation8 + $0x24] sm:$0xf]
        %v1568 = vld [vmem:[#allocation8 + $0x28] sm:$0xf]
        %v1569 = vld [vmem:[#allocation8 + $0x2c] sm:$0xf]
        %v1570 = vld [vmem:[#allocation8 + $0x30] sm:$0xf]
        %v1571 = vld [vmem:[#allocation8 + $0x34] sm:$0xf]
        %v1572 = vld [vmem:[#allocation8 + $0x38] sm:$0xf]
        %v1573 = vld [vmem:[#allocation8 + $0x3c] sm:$0xf]
        %v1574 = vld [vmem:[%s12] sm:$0x1]
        %v1576 = vlaneseq
        %v1577 = vshrl.u32 %v1576, 7
        %v1578 = vsub.s32 0, %v1577
        %v1579 = vrot.slane %v1574, %v1578
        %v1597 = vunpack.c.l.b16 %v1558
        %v1598 = vunpack.c.l.b16 %v1559
        %v1599 = vunpack.c.l.b16 %v1560
        %v1600 = vunpack.c.l.b16 %v1561
        %v1601 = vunpack.c.l.b16 %v1562
        %v1602 = vunpack.c.l.b16 %v1563
        %v1603 = vunpack.c.l.b16 %v1564
        %v1604 = vunpack.c.l.b16 %v1565
        %v1605 = vunpack.c.l.b16 %v1566
        %v1606 = vunpack.c.l.b16 %v1567
        %v1607 = vunpack.c.l.b16 %v1568
        %v1608 = vunpack.c.l.b16 %v1569
        %v1609 = vunpack.c.l.b16 %v1570
        %v1610 = vunpack.c.l.b16 %v1571
        %v1611 = vunpack.c.l.b16 %v1572
        %v1612 = vunpack.c.l.b16 %v1573
        %v1613 = vpack.c.b16 %v1598, %v1597
        %v1614 = vpack.c.b16 %v1600, %v1599
        %v1615 = vpack.c.b16 %v1602, %v1601
        %v1616 = vpack.c.b16 %v1604, %v1603
        %v1617 = vpack.c.b16 %v1606, %v1605
        %v1618 = vpack.c.b16 %v1608, %v1607
        %v1619 = vpack.c.b16 %v1610, %v1609
        %v1620 = vpack.c.b16 %v1612, %v1611
        %1629 = vmatprep.subr.bf16.mxu0 0
        %1630 = vmatpush1.bf16.msra.mxu0 %v1613
        %1631 = vmatprep.subr.bf16.mxu0 0
        %1632 = vmatpush1.bf16.msra.mxu0 %v1614
        %1633 = vmatprep.subr.bf16.mxu0 0
        %1634 = vmatpush1.bf16.msra.mxu0 %v1615
        %1635 = vmatprep.subr.bf16.mxu0 0
        %1636 = vmatpush1.bf16.msra.mxu0 %v1616
        %1637 = vmatprep.subr.bf16.mxu0 0
        %1638 = vmatpush1.bf16.msra.mxu0 %v1617
        %1639 = vmatprep.subr.bf16.mxu0 0
        %1640 = vmatpush1.bf16.msra.mxu0 %v1618
        %1641 = vmatprep.subr.bf16.mxu0 0
        %1642 = vmatpush1.bf16.msra.mxu0 %v1619
        %1643 = vmatprep.subr.bf16.mxu0 0
        %1644 = vmatpush1.bf16.msra.mxu0 %v1620
        %1645 = vmatprep.subr.bf16.mxu0 0
        %1646 = vmatpush1.bf16.msra.mxu0 0
        %1647 = vmatprep.subr.bf16.mxu0 0
        %1648 = vmatpush1.bf16.msra.mxu0 0
        %1649 = vmatprep.subr.bf16.mxu0 0
        %1650 = vmatpush1.bf16.msra.mxu0 0
        %1651 = vmatprep.subr.bf16.mxu0 0
        %1652 = vmatpush1.bf16.msra.mxu0 0
        %1653 = vmatprep.subr.bf16.mxu0 0
        %1654 = vmatpush1.bf16.msra.mxu0 0
        %1655 = vmatprep.subr.bf16.mxu0 0
        %1656 = vmatpush1.bf16.msra.mxu0 0
        %1657 = vmatprep.subr.bf16.mxu0 0
        %1658 = vmatpush1.bf16.msra.mxu0 0
        %1659 = vmatprep.subr.bf16.mxu0 0
        %1660 = vmatpush1.bf16.msra.mxu0 0
        %1661 = vmatprep.mubr.bf16.mxu0 0
        %1662 = vmatmul.mubr.bf16.gmra.mrb[0].mxu0 %v1554
        %v1663 = vpop.f32.mrb[0].mxu0
        %v1664 = vadd.f32 %v1579, %v1663
        %v1665 = vpop.f32.mrb[0].mxu0
        %v1666 = vpop.f32.mrb[0].mxu0
        %v1667 = vadd.f32 %v1579, %v1666
        %v1668 = vpop.f32.mrb[0].mxu0
        %1669 = vmatprep.mubr.bf16.mxu0 0
        %1670 = vmatmul.mubr.bf16.gmra.mrb[0].mxu0 %v1555
        %v1671 = vpop.f32.mrb[0].mxu0
        %v1672 = vadd.f32 %v1579, %v1671
        %v1673 = vpop.f32.mrb[0].mxu0
        %v1674 = vpop.f32.mrb[0].mxu0
        %v1675 = vadd.f32 %v1579, %v1674
        %v1676 = vpop.f32.mrb[0].mxu0
        %1677 = vmatprep.mubr.bf16.mxu0 0
        %1678 = vmatmul.mubr.bf16.gmra.mrb[0].mxu0 %v1556
        %v1679 = vpop.f32.mrb[0].mxu0
        %v1680 = vadd.f32 %v1579, %v1679
        %v1681 = vpop.f32.mrb[0].mxu0
        %v1682 = vpop.f32.mrb[0].mxu0
        %v1683 = vadd.f32 %v1579, %v1682
        %v1684 = vpop.f32.mrb[0].mxu0
        %1685 = vmatprep.mubr.bf16.mxu0 0
        %1686 = vmatmul.mubr.bf16.gmra.mrb[0].mxu0 %v1557
        %v1687 = vpop.f32.mrb[0].mxu0
        %v1688 = vadd.f32 %v1579, %v1687
        %v1689 = vpop.f32.mrb[0].mxu0
        %v1690 = vpop.f32.mrb[0].mxu0
        %v1691 = vadd.f32 %v1579, %v1690
        %v1692 = vpop.f32.mrb[0].mxu0
        %1693 = vdwg.mxu0
        %v1694 = vadd.f32 %v499, %v1664
        %v1695 = vadd.f32 %v500, %v1667
        %v1696 = vadd.f32 %v501, %v1672
        %v1697 = vadd.f32 %v502, %v1675
        %v1698 = vadd.f32 %v503, %v1680
        %v1699 = vadd.f32 %v504, %v1683
        %v1700 = vadd.f32 %v505, %v1688
        %v1701 = vadd.f32 %v506, %v1691
        %1702 = vst [vmem:[%s492] sm:$0xff] %v1694
        %1703 = vst [vmem:[%s492 + $0x8] sm:$0xff] %v1695
        %1704 = vst [vmem:[%s492 + $0x10] sm:$0xff] %v1696
        %1705 = vst [vmem:[%s492 + $0x18] sm:$0xff] %v1697
        %1706 = vst [vmem:[%s492 + $0x20] sm:$0xff] %v1698
        %1707 = vst [vmem:[%s492 + $0x28] sm:$0xff] %v1699
        %1708 = vst [vmem:[%s492 + $0x30] sm:$0xff] %v1700
        %1709 = vst [vmem:[%s492 + $0x38] sm:$0xff] %v1701
        %s1710 = sand.u32 %s316, 1
        %s1711 = scalar_lea.sflag [#allocation4], %s1710
        %s1712 = sand.u32 %s316, 1
        %s1713 = smul.addr %s1712, 64
        %s1714 = scalar_lea.vmem [#allocation10], %s1713
        // Predicated region
        $region89: #{tpu_custom_call.1} parent=71 // pred_check
          %p1715 = pneg %p326
        $region90: #{tpu_custom_call.1} parent=71 // pred_check_branch
          %1717 = sbr.rel (%p1715) target = $region92
        $region91: #{tpu_custom_call.1} parent=71 // pred_region
          %s1719 = ssub.s32 1024, 1024
          %1720 = vsyncadd %s1711, %s1719
          %s1721 = smul.addr %s30, 8
          %s1722 = smul.addr %s1721, 128
          %s1723 = scalar_lea.hbm %s13, %s1722
          %s1724 = sshll.u32 %s1714, 4
          %s1725 = int_to_ptr.vmem [resolvable:$true] %s1724
          %1730 = dma.vmem_to_hbm [thread:$0]  %s1725, 1024, %s1723, %s1711, 128, 128, 8
        $region92: #{tpu_custom_call.1} parent=71 // pred_fallthru
          _
      $region72: #{tpu_custom_call.1} parent=5 // pred_fallthru
        _
      %p1731 = scmp.le.s32.totalorder 2, %s25
      // Predicated region
      $region93: #{tpu_custom_call.1} parent=5 // pred_check
        %p1732 = pneg %p1731
      $region94: #{tpu_custom_call.1} parent=5 // pred_check_branch
        %1734 = sbr.rel (%p1732) target = $region96
      $region95: #{tpu_custom_call.1} parent=5 // pred_region
        %s1735 = ssub.s32 %s25, 2
        // Predicated region
        $region97: #{tpu_custom_call.1} parent=95 // pred_check
          %p1736 = pneg %p332
        $region98: #{tpu_custom_call.1} parent=95 // pred_check_branch
          %1738 = sbr.rel (%p1736) target = $region100
        $region99: #{tpu_custom_call.1} parent=95 // pred_region
          %s1739 = sand.u32 %s317, 1
          %s1740 = scalar_lea.sflag [#allocation4], %s1739
          %s1741 = sand.u32 %s317, 1
          %s1742 = smul.addr %s1741, 64
          %s1743 = scalar_lea.vmem [#allocation10], %s1742
          %1744 = dma.done %s1740, 1024
        $region100: #{tpu_custom_call.1} parent=95 // pred_fallthru
          _
      $region96: #{tpu_custom_call.1} parent=5 // pred_fallthru
        _
    $region6: #{tpu_custom_call.1} parent=1 // loop_footer
      %s29 = sadd.s32 1, %s25
    $region7: #{tpu_custom_call.1} parent=1 // loop_footer_branch
      %24 = sbr.rel target = $region3
    $region8: #{tpu_custom_call.1} parent=1 // loop_exit
      _
    %1745 = vsyncpa [#allocation3], 1
    %s1746 = scalar_lea.sflag [#allocation3], 1
    %1747 = vsyncpa %s1746, 1
    %1748 = vsyncpa [#allocation6], 1
    %1749 = vsyncpa [#allocation9], 1
    %1750 = vsyncpa [#allocation4], 1
    %s1751 = scalar_lea.sflag [#allocation4], 1
    %1752 = vsyncpa %s1751, 1

</llo_original>
